<compile_context>
chip_gen: v5e
topology: v5e:2x2
jax: 0.10.0
libtpu: 0.0.40
codegen_flags: <defaults>
</compile_context>

<pallas_src>
import functools

import jax
import jax.numpy as jnp
import numpy as np
from jax.experimental import pallas as pl
from jax.experimental.pallas import tpu as pltpu

F32 = jnp.float32
LANE = 128
TILE_CAP = 1024                       # 1024 fits comfortably on v5e/v6e/v7x
VMEM_CAP = 40 * 1024 * 1024           # stay well under v7x's 64 MiB physical VMEM


def _round_up(x, m):
    return ((x + m - 1) // m) * m


def _pick_tile(n):
    rows = _round_up(max(n, 1), LANE)
    if rows <= LANE:
        return LANE
    # at least two row tiles so the "parallel" axis spans both v7x TensorCores
    return min(TILE_CAP, _round_up((rows + 1) // 2, LANE))


def _grid_setup(n):
    tile = _pick_tile(n)
    rows = _round_up(max(n, 1), tile)
    return tile, rows, rows // tile


def _pad_rows(x, rows):
    return x if x.shape[0] == rows else jnp.pad(x, ((0, rows - x.shape[0]), (0, 0)))


def _pad_cols(x, cols):
    return x if x.shape[1] == cols else jnp.pad(x, ((0, 0), (0, cols - x.shape[1])))


# ---------------------------------------------------------------------------
# in-kernel math helpers (operate on values already loaded from refs)
# ---------------------------------------------------------------------------
def _mm(x, w):
    return jnp.dot(x, w, preferred_element_type=F32)


def _softplus(x):
    # numerically stable softplus, matches torch.nn.Softplus (beta=1)
    return jnp.maximum(x, 0.0) + jnp.log1p(jnp.exp(-jnp.abs(x)))


def _leaky_relu(x, slop):
    return jnp.where(x >= 0.0, x, slop * x)


def _vae_head_tail(p, s, g, w0m, b0m, w0l, b0l, w1m, b1m, w1l, b1l, wh, bh,
                   *, h_real, slop):
    """Fused VAE(2H->H, 2 layers for mean & logstd) + Linear(H,1)+LeakyReLU head.

    p, s are the two H-wide halves of the DualEmb output cat([l1*l2, l1+l2]);
    w0m/w0l hold the layer-0 weights as (2Hp, Hp) so the concat is replaced by
    two accumulating K=Hp matmuls.  Returns per-row (pred, kld) of shape (tile,).
    """
    hp = p.shape[-1]
    m0 = _softplus(_mm(p, w0m[:hp]) + _mm(s, w0m[hp:]) + b0m)
    l0 = _softplus(_mm(p, w0l[:hp]) + _mm(s, w0l[hp:]) + b0l)
    mean = _softplus(_mm(m0, w1m) + b1m)
    logstd = _softplus(_mm(l0, w1l) + b1l)
    std = jnp.exp(0.5 * logstd)              # single EUP exp; exp(logstd) == std*std
    z = mean + g * std
    lane = jax.lax.broadcasted_iota(jnp.int32, mean.shape, 1)
    t = jnp.where(lane < h_real, 1.0 + logstd - mean * mean - std * std, 0.0)
    kld = -0.5 * jnp.sum(t, axis=-1)                                   # (tile,)
    pred = _leaky_relu(jnp.sum(z * wh, axis=-1) + bh, slop)            # (tile,)
    return pred, kld


# ---------------------------------------------------------------------------
# Pallas kernels
# ---------------------------------------------------------------------------
def atom_type_kernel(x_ref, w1, b1, w2, b2, w3, b3, out_ref):
    # MLPClassifier(3 layers): (Linear + Softplus) x 3
    h = _softplus(_mm(x_ref[...], w1[...]) + b1[...])
    h = _softplus(_mm(h, w2[...]) + b2[...])
    out_ref[...] = _softplus(_mm(h, w3[...]) + b3[...])


def bond_kernel(r0_ref, r1_ref, g_ref,
                wd_t, wc1, bc1, wc2, bc2,
                wd_l, w0m, b0m, w0l, b0l, w1m, b1m, w1l, b1l, wh, bh,
                type_ref, pk_ref, *, h_real, slop):
    # fused: BilinearClassifier (bond type) + DualVAE + head (bond length)
    r0 = r0_ref[...]
    r1 = r1_ref[...]
    hp = g_ref.shape[-1]

    # --- bond type classifier (shares the r0/r1 DMA with the VAE) ---
    t1 = _mm(r0, wd_t[...])
    t2 = _mm(r1, wd_t[...])
    wc1v = wc1[...]
    hc = _softplus(_mm(t1 * t2, wc1v[:hp]) + _mm(t1 + t2, wc1v[hp:]) + bc1[...])
    type_ref[...] = _softplus(_mm(hc, wc2[...]) + bc2[...])

    # --- bond length DualVAE + head ---
    l1 = _mm(r0, wd_l[...])
    l2 = _mm(r1, wd_l[...])
    pred, kld = _vae_head_tail(
        l1 * l2, l1 + l2, g_ref[...],
        w0m[...], b0m[...], w0l[...], b0l[...],
        w1m[...], b1m[...], w1l[...], b1l[...], wh[...], bh[0, 0],
        h_real=h_real, slop=slop)
    pk_ref[...] = jnp.stack([pred, kld], axis=0)           # lane-dense (2, tile)


def angle_kernel(a0_ref, a1_ref, a2_ref, g_ref,
                 wd1, wd2, w0m, b0m, w0l, b0l, w1m, b1m, w1l, b1l, wh, bh,
                 pk_ref, *, h_real, slop):
    # TriVAE + head
    hp = g_ref.shape[-1]
    wd1v = wd1[...]
    x1 = _mm(a0_ref[...], wd1v)
    x2 = _mm(a1_ref[...], wd1v)
    x3 = _mm(a2_ref[...], wd1v)
    wd2v = wd2[...]
    e1 = _mm(x1 * x2, wd2v[:hp]) + _mm(x1 + x2, wd2v[hp:])
    e2 = _mm(x2 * x3, wd2v[:hp]) + _mm(x2 + x3, wd2v[hp:])
    pred, kld = _vae_head_tail(
        e1 * e2, e1 + e2, g_ref[...],
        w0m[...], b0m[...], w0l[...], b0l[...],
        w1m[...], b1m[...], w1l[...], b1l[...], wh[...], bh[0, 0],
        h_real=h_real, slop=slop)
    pk_ref[...] = jnp.stack([pred, kld], axis=0)


def torsion_kernel(hl_ref, hu_ref, hv_ref, hk_ref, g_ref,
                   wuv, wra, wrb, wall,
                   w0m, b0m, w0l, b0l, w1m, b1m, w1l, b1l, wh, bh,
                   pk_ref, *, h_real, slop):
    # QuadVAE + head
    hp = g_ref.shape[-1]
    wuvv = wuv[...]
    u = _mm(hu_ref[...], wuvv)
    v = _mm(hv_ref[...], wuvv)
    p_uv, s_uv = u * v, u + v
    wrav, wrbv = wra[...], wrb[...]
    hl = hl_ref[...]
    hk = hk_ref[...]
    la, lb = _mm(hl, wrav), _mm(hl, wrbv)
    ka, kb = _mm(hk, wrav), _mm(hk, wrbv)
    wallv = wall[...]
    q1 = (_mm(p_uv * la, wallv[:hp]) + _mm(s_uv * lb, wallv[hp:2 * hp])
          + _mm(p_uv + la, wallv[2 * hp:3 * hp]) + _mm(s_uv + lb, wallv[3 * hp:]))
    q2 = (_mm(p_uv * ka, wallv[:hp]) + _mm(s_uv * kb, wallv[hp:2 * hp])
          + _mm(p_uv + ka, wallv[2 * hp:3 * hp]) + _mm(s_uv + kb, wallv[3 * hp:]))
    pred, kld = _vae_head_tail(
        q1 * q2, q1 + q2, g_ref[...],
        w0m[...], b0m[...], w0l[...], b0l[...],
        w1m[...], b1m[...], w1l[...], b1l[...], wh[...], bh[0, 0],
        h_real=h_real, slop=slop)
    pk_ref[...] = jnp.stack([pred, kld], axis=0)


# ---------------------------------------------------------------------------
# pallas_call plumbing
# ---------------------------------------------------------------------------
def _row_spec(tile, width):
    return pl.BlockSpec((tile, width), lambda i: (i, 0))


def _const_spec(arr):
    return pl.BlockSpec(arr.shape, lambda i: (0, 0))


def _pk_spec(tile):
    # transposed (rows-on-lanes) output for the head prediction + per-row KLD
    return pl.BlockSpec((2, tile), lambda i: (0, i))


def _compiler_params(tile, stream_widths, extra_elems, weights):
    # double-buffered row tiles + resident weights (conservatively x2) + slack
    stream_bytes = 2 * 4 * (tile * sum(stream_widths) + sum(extra_elems))
    weight_bytes = 2 * 4 * sum(int(w.size) for w in weights)
    vmem = int(min(VMEM_CAP, max(16 << 20, stream_bytes + weight_bytes + (4 << 20))))
    return pltpu.CompilerParams(
        dimension_semantics=("parallel",),
        vmem_limit_bytes=vmem,
    )


def _run_atom(params, Xp, n):
    in_pad, ne_pad = params['in_pad'], params['ne_pad']
    tile, rows, nt = _grid_setup(n)
    weights = params['atom_cls']
    out = pl.pallas_call(
        atom_type_kernel,
        out_shape=jax.ShapeDtypeStruct((rows, ne_pad), F32),
        grid=(nt,),
        in_specs=[_row_spec(tile, in_pad)] + [_const_spec(w) for w in weights],
        out_specs=_row_spec(tile, ne_pad),
        compiler_params=_compiler_params(tile, [in_pad, ne_pad], [], weights),
    )(_pad_rows(Xp, rows), *weights)
    return out[:n, :params['num_elems']]


def _run_bond(params, r0, r1, g, slop):
    in_pad, hp, h = params['in_pad'], params['hp'], params['hidden']
    nb_pad = params['nb_pad']
    n = r0.shape[0]
    tile, rows, nt = _grid_setup(n)
    weights = params['bond']
    kern = functools.partial(bond_kernel, h_real=h, slop=slop)
    gp = _pad_rows(_pad_cols(g, hp), rows)
    type_out, pk = pl.pallas_call(
        kern,
        out_shape=(jax.ShapeDtypeStruct((rows, nb_pad), F32),
                   jax.ShapeDtypeStruct((2, rows), F32)),
        grid=(nt,),
        in_specs=[_row_spec(tile, in_pad), _row_spec(tile, in_pad),
                  _row_spec(tile, hp)] + [_const_spec(w) for w in weights],
        out_specs=(_row_spec(tile, nb_pad), _pk_spec(tile)),
        compiler_params=_compiler_params(
            tile, [in_pad, in_pad, hp, nb_pad], [2 * tile], weights),
    )(_pad_rows(r0, rows), _pad_rows(r1, rows), gp, *weights)
    bond_type = type_out[:n, :params['num_bond_types']]
    return bond_type, pk[0, :n].reshape(n, 1), jnp.sum(pk[1, :n])


def _run_angle(params, a0, a1, a2, g, slop):
    in_pad, hp, h = params['in_pad'], params['hp'], params['hidden']
    n = a0.shape[0]
    tile, rows, nt = _grid_setup(n)
    weights = params['angle']
    kern = functools.partial(angle_kernel, h_real=h, slop=slop)
    gp = _pad_rows(_pad_cols(g, hp), rows)
    pk = pl.pallas_call(
        kern,
        out_shape=jax.ShapeDtypeStruct((2, rows), F32),
        grid=(nt,),
        in_specs=[_row_spec(tile, in_pad)] * 3 + [_row_spec(tile, hp)]
                 + [_const_spec(w) for w in weights],
        out_specs=_pk_spec(tile),
        compiler_params=_compiler_params(
            tile, [in_pad] * 3 + [hp], [2 * tile], weights),
    )(_pad_rows(a0, rows), _pad_rows(a1, rows), _pad_rows(a2, rows), gp, *weights)
    return pk[0, :n].reshape(n, 1), jnp.sum(pk[1, :n])


def _run_torsion(params, hl, hu, hv, hk, g, slop):
    in_pad, hp, h = params['in_pad'], params['hp'], params['hidden']
    n = hl.shape[0]
    tile, rows, nt = _grid_setup(n)
    weights = params['torsion']
    kern = functools.partial(torsion_kernel, h_real=h, slop=slop)
    gp = _pad_rows(_pad_cols(g, hp), rows)
    pk = pl.pallas_call(
        kern,
        out_shape=jax.ShapeDtypeStruct((2, rows), F32),
        grid=(nt,),
        in_specs=[_row_spec(tile, in_pad)] * 4 + [_row_spec(tile, hp)]
                 + [_const_spec(w) for w in weights],
        out_specs=_pk_spec(tile),
        compiler_params=_compiler_params(
            tile, [in_pad] * 4 + [hp], [2 * tile], weights),
    )(_pad_rows(hl, rows), _pad_rows(hu, rows), _pad_rows(hv, rows),
      _pad_rows(hk, rows), gp, *weights)
    return pk[0, :n].reshape(n, 1), jnp.sum(pk[1, :n])


# ---------------------------------------------------------------------------
# deterministic parameter initialization (padded / fused layout)
# ---------------------------------------------------------------------------
def init_params(key, in_size, hidden, num_elems, num_bond_types):
    H = hidden
    Hp = _round_up(H, LANE)
    in_pad = _round_up(in_size, LANE)
    ne_pad = _round_up(num_elems, LANE)
    nb_pad = _round_up(num_bond_types, LANE)
    keys = iter(jax.random.split(key, 64))

    def w(shape, scale=0.1):
        return scale * jax.random.normal(next(keys), shape, dtype=F32)

    def pad(mat, rows, cols):
        return jnp.zeros((rows, cols), F32).at[:mat.shape[0], :mat.shape[1]].set(mat)

    def two_block(mat):   # (2H, H) -> (2Hp, Hp): halves at rows [0:H) / [Hp:Hp+H)
        out = jnp.zeros((2 * Hp, Hp), F32)
        return out.at[:H, :H].set(mat[:H]).at[Hp:Hp + H, :H].set(mat[H:])

    def four_block(mat):  # (4H, H) -> (4Hp, Hp)
        out = jnp.zeros((4 * Hp, Hp), F32)
        for k in range(4):
            out = out.at[k * Hp:k * Hp + H, :H].set(mat[k * H:(k + 1) * H])
        return out

    def vae_and_head():
        # VAE(2H -> H, 2 layers each for mean/logstd) + Linear(H, 1) head
        return [
            two_block(w((2 * H, H))), pad(w((1, H), 0.05), 1, Hp),   # w0m, b0m
            two_block(w((2 * H, H))), pad(w((1, H), 0.05), 1, Hp),   # w0l, b0l
            pad(w((H, H)), Hp, Hp), pad(w((1, H), 0.05), 1, Hp),     # w1m, b1m
            pad(w((H, H)), Hp, Hp), pad(w((1, H), 0.05), 1, Hp),     # w1l, b1l
            pad(w((1, H)), 1, Hp), w((1, 1), 0.05),                  # wh, bh
        ]

    p = {'hidden': H, 'hp': Hp, 'in_size': in_size, 'in_pad': in_pad,
         'num_elems': num_elems, 'ne_pad': ne_pad,
         'num_bond_types': num_bond_types, 'nb_pad': nb_pad}

    # atom_type_classifier: MLPClassifier(3, in_size, H, num_elems)
    p['atom_cls'] = [
        pad(w((in_size, H)), in_pad, Hp), pad(w((1, H), 0.05), 1, Hp),
        pad(w((H, H)), Hp, Hp), pad(w((1, H), 0.05), 1, Hp),
        pad(w((H, num_elems)), Hp, ne_pad), pad(w((1, num_elems), 0.05), 1, ne_pad),
    ]

    # bond_type_classifier (BilinearClassifier) + bond_length DualVAE + head
    p['bond'] = [
        pad(w((in_size, H)), in_pad, Hp),                        # wd_t (DualEmb, type)
        two_block(w((2 * H, H))), pad(w((1, H), 0.05), 1, Hp),   # wc1, bc1
        pad(w((H, num_bond_types)), Hp, nb_pad),
        pad(w((1, num_bond_types), 0.05), 1, nb_pad),            # wc2, bc2
        pad(w((in_size, H)), in_pad, Hp),                        # wd_l (DualEmb, length)
    ] + vae_and_head()

    # bond_angle TriVAE + head
    p['angle'] = [
        pad(w((in_size, H)), in_pad, Hp),                        # wd1 (dual_emb1)
        two_block(w((2 * H, H))),                                # wd2 (dual_emb2)
    ] + vae_and_head()

    # torsion QuadVAE + head
    wred = w((in_size, 2 * H))
    p['torsion'] = [
        pad(w((in_size, H)), in_pad, Hp),                        # wuv (dual_emb_uv)
        pad(wred[:, :H], in_pad, Hp), pad(wred[:, H:], in_pad, Hp),  # reduce split
        four_block(w((4 * H, H))),                               # dual_emb_all
    ] + vae_and_head()
    return p


# ---------------------------------------------------------------------------
# forward pass (mirrors PMNetPretrainer.forward)
# ---------------------------------------------------------------------------
def pmnet_pretrainer_forward(params, X, bonds, idx_ijk, plane, key, slop=0.1):
    H = params['hidden']
    Xp = _pad_cols(X.astype(F32), params['in_pad'])

    # torch.rand-style uniform noise, generated in JAX and streamed row-tiled.
    # TODO(synk): use the in-kernel TPU PRNG on real hardware to drop this stream.
    kb, ka, kt = jax.random.split(key, 3)
    g_bond = jax.random.uniform(kb, (bonds.shape[1], H), dtype=F32)
    g_ang = jax.random.uniform(ka, (idx_ijk.shape[0], H), dtype=F32)
    g_tor = jax.random.uniform(kt, (plane.shape[0], H), dtype=F32)

    atom_type_pred = _run_atom(params, Xp, X.shape[0])

    # TODO(synk): row gathers stay in XLA; an in-kernel gather (scalar-prefetched
    # indices + per-tile DMA from X in pl.ANY) would remove this HBM round-trip.
    r0 = jnp.take(Xp, bonds[0], axis=0)
    r1 = jnp.take(Xp, bonds[1], axis=0)
    bond_type_pred, bond_length_pred, kld_len = _run_bond(params, r0, r1, g_bond, slop)

    a0 = jnp.take(Xp, idx_ijk[:, 0], axis=0)
    a1 = jnp.take(Xp, idx_ijk[:, 1], axis=0)
    a2 = jnp.take(Xp, idx_ijk[:, 2], axis=0)
    bond_angle_pred, kld_ang = _run_angle(params, a0, a1, a2, g_ang, slop)

    hl = jnp.take(Xp, plane[:, 0], axis=0)
    hu = jnp.take(Xp, plane[:, 1], axis=0)
    hv = jnp.take(Xp, plane[:, 2], axis=0)
    hk = jnp.take(Xp, plane[:, 3], axis=0)
    torsion_pred, kld_tor = _run_torsion(params, hl, hu, hv, hk, g_tor, slop)

    return (atom_type_pred, bond_type_pred, bond_length_pred,
            bond_angle_pred, torsion_pred, kld_len, kld_ang, kld_tor)


# ---------------------------------------------------------------------------
# pure-JAX, unfused/unpadded reference of the full forward (torch-style math)
# ---------------------------------------------------------------------------
def _reference_forward(params, X, bonds, idx_ijk, plane, key, slop=0.1):
    H, Hp = params['hidden'], params['hp']
    ins, ne, nb = params['in_size'], params['num_elems'], params['num_bond_types']
    dot = functools.partial(jnp.dot, precision=jax.lax.Precision.HIGHEST)
    sp = _softplus

    def unblock2(wp):
        return jnp.concatenate([wp[:H, :H], wp[Hp:Hp + H, :H]], axis=0)

    def unblock4(wp):
        return jnp.concatenate([wp[k * Hp:k * Hp + H, :H] for k in range(4)], axis=0)

    def vae_and_head(h_cat, g, vae):
        w0m, b0m, w0l, b0l, w1m, b1m, w1l, b1l, wh, bh = vae
        mean = sp(dot(sp(dot(h_cat, unblock2(w0m)) + b0m[:, :H]), w1m[:H, :H]) + b1m[:, :H])
        logstd = sp(dot(sp(dot(h_cat, unblock2(w0l)) + b0l[:, :H]), w1l[:H, :H]) + b1l[:, :H])
        z = mean + g * jnp.exp(0.5 * logstd)
        kld = -0.5 * jnp.sum(1.0 + logstd - jnp.square(mean) - jnp.exp(logstd))
        pred = dot(z, wh[:1, :H].T) + bh
        return jnp.where(pred >= 0, pred, slop * pred), kld

    kb, ka, kt = jax.random.split(key, 3)
    g_bond = jax.random.uniform(kb, (bonds.shape[1], H), dtype=F32)
    g_ang = jax.random.uniform(ka, (idx_ijk.shape[0], H), dtype=F32)
    g_tor = jax.random.uniform(kt, (plane.shape[0], H), dtype=F32)

    w1, b1, w2, b2, w3, b3 = params['atom_cls']
    h = sp(dot(X, w1[:ins, :H]) + b1[:, :H])
    h = sp(dot(h, w2[:H, :H]) + b2[:, :H])
    atom = sp(dot(h, w3[:H, :ne]) + b3[:, :ne])

    r0, r1 = X[bonds[0]], X[bonds[1]]
    wd_t, wc1, bc1, wc2, bc2, wd_l = params['bond'][:6]
    vae_b = params['bond'][6:]
    t1, t2 = dot(r0, wd_t[:ins, :H]), dot(r1, wd_t[:ins, :H])
    hcat = jnp.concatenate([t1 * t2, t1 + t2], axis=-1)
    bond_type = sp(dot(sp(dot(hcat, unblock2(wc1)) + bc1[:, :H]), wc2[:H, :nb]) + bc2[:, :nb])
    l1, l2 = dot(r0, wd_l[:ins, :H]), dot(r1, wd_l[:ins, :H])
    bond_len, kld_len = vae_and_head(jnp.concatenate([l1 * l2, l1 + l2], -1), g_bond, vae_b)

    a0, a1, a2 = X[idx_ijk[:, 0]], X[idx_ijk[:, 1]], X[idx_ijk[:, 2]]
    wd1, wd2 = params['angle'][:2]
    vae_a = params['angle'][2:]
    x1, x2, x3 = dot(a0, wd1[:ins, :H]), dot(a1, wd1[:ins, :H]), dot(a2, wd1[:ins, :H])
    e1 = dot(jnp.concatenate([x1 * x2, x1 + x2], -1), unblock2(wd2))
    e2 = dot(jnp.concatenate([x2 * x3, x2 + x3], -1), unblock2(wd2))
    ang, kld_ang = vae_and_head(jnp.concatenate([e1 * e2, e1 + e2], -1), g_ang, vae_a)

    hl, hu, hv, hk = X[plane[:, 0]], X[plane[:, 1]], X[plane[:, 2]], X[plane[:, 3]]
    wuv, wra, wrb, wall = params['torsion'][:4]
    vae_t = params['torsion'][4:]
    u, v = dot(hu, wuv[:ins, :H]), dot(hv, wuv[:ins, :H])
    h_uv = jnp.concatenate([u * v, u + v], axis=-1)
    wred = jnp.concatenate([wra[:ins, :H], wrb[:ins, :H]], axis=1)
    h_l, h_k = dot(hl, wred), dot(hk, wred)
    h_luv = jnp.concatenate([h_uv * h_l, h_uv + h_l], axis=-1)
    h_uvk = jnp.concatenate([h_uv * h_k, h_uv + h_k], axis=-1)
    q1, q2 = dot(h_luv, unblock4(wall)), dot(h_uvk, unblock4(wall))
    tor, kld_tor = vae_and_head(jnp.concatenate([q1 * q2, q1 + q2], -1), g_tor, vae_t)

    return atom, bond_type, bond_len, ang, tor, kld_len, kld_ang, kld_tor


if __name__ == "__main__":
    key = jax.random.PRNGKey(0)
    k_x, k_param, k_noise, k_idx = jax.random.split(key, 4)

    N, IN_SIZE, HIDDEN = 16, 32, 32
    NUM_ELEMS, NUM_BOND_TYPES = 5, 4
    E, T, P = 8, 8, 8

    X = jax.random.normal(k_x, (N, IN_SIZE), dtype=F32)
    kb, kt, kp = jax.random.split(k_idx, 3)
    bonds = jax.random.randint(kb, (2, E), 0, N, dtype=jnp.int32)
    idx_ijk = jax.random.randint(kt, (T, 3), 0, N, dtype=jnp.int32)
    plane = jax.random.randint(kp, (P, 4), 0, N, dtype=jnp.int32)

    params = init_params(k_param, IN_SIZE, HIDDEN, NUM_ELEMS, NUM_BOND_TYPES)

    outs = pmnet_pretrainer_forward(params, X, bonds, idx_ijk, plane, k_noise)
    outs = jax.block_until_ready(outs)

    assert outs[0].shape == (N, NUM_ELEMS)
    assert outs[1].shape == (E, NUM_BOND_TYPES)
    assert outs[2].shape == (E, 1)
    assert outs[3].shape == (T, 1)
    assert outs[4].shape == (P, 1)
    assert all(bool(jnp.isfinite(o).all()) for o in outs[:5])
    assert all(bool(jnp.isfinite(o)) for o in outs[5:])

    # cross-check the entire forward (same noise) against an unfused, unpadded
    # torch-style pure-JAX reference
    ref = _reference_forward(params, X, bonds, idx_ijk, plane, k_noise, slop=0.1)
    for got, want in zip(outs, ref):
        np.testing.assert_allclose(np.asarray(got), np.asarray(want),
                                   rtol=2e-2, atol=2e-3)

    print("KERNEL_OK")
</pallas_src>

<mosaic_0001>
module attributes {stable_mosaic.version = 11 : i64} {
  func.func @atom_type_kernel(%arg0: i32, %arg1: memref<128x128xf32, #tpu.memory_space<vmem>>, %arg2: memref<128x128xf32, #tpu.memory_space<vmem>>, %arg3: memref<1x128xf32, #tpu.memory_space<vmem>>, %arg4: memref<128x128xf32, #tpu.memory_space<vmem>>, %arg5: memref<1x128xf32, #tpu.memory_space<vmem>>, %arg6: memref<128x128xf32, #tpu.memory_space<vmem>>, %arg7: memref<1x128xf32, #tpu.memory_space<vmem>>, %arg8: memref<128x128xf32, #tpu.memory_space<vmem>>) attributes {dimension_semantics = [#tpu.dimension_semantics<parallel>], iteration_bounds = array<i64: 1>, scalar_prefetch = 0 : i64, scratch_operands = 0 : i64, tpu.core_type = #tpu.core_type<tc>, window_params = [{transform_indices = @transform_0, window_bounds = array<i64: 128, 128>}, {pipeline_mode = #tpu.pipeline_mode<synchronous>, transform_indices = @transform_1, window_bounds = array<i64: 128, 128>}, {pipeline_mode = #tpu.pipeline_mode<synchronous>, transform_indices = @transform_2, window_bounds = array<i64: 1, 128>}, {pipeline_mode = #tpu.pipeline_mode<synchronous>, transform_indices = @transform_3, window_bounds = array<i64: 128, 128>}, {pipeline_mode = #tpu.pipeline_mode<synchronous>, transform_indices = @transform_4, window_bounds = array<i64: 1, 128>}, {pipeline_mode = #tpu.pipeline_mode<synchronous>, transform_indices = @transform_5, window_bounds = array<i64: 128, 128>}, {pipeline_mode = #tpu.pipeline_mode<synchronous>, transform_indices = @transform_6, window_bounds = array<i64: 1, 128>}, {transform_indices = @transform_7, window_bounds = array<i64: 128, 128>}]} {
    %c0 = arith.constant 0 : index
    %c0_0 = arith.constant 0 : index
    %0 = vector.load %arg1[%c0, %c0_0] : memref<128x128xf32, #tpu.memory_space<vmem>>, vector<128x128xf32>
    %c0_1 = arith.constant 0 : index
    %c0_2 = arith.constant 0 : index
    %1 = vector.load %arg2[%c0_1, %c0_2] : memref<128x128xf32, #tpu.memory_space<vmem>>, vector<128x128xf32>
    %cst = arith.constant dense<0.000000e+00> : vector<128x128xf32>
    %2 = tpu.matmul %0, %1, %cst {dimension_numbers = #tpu.dot_dimension_numbers<[1], [0], [0], [1], [0, 0, 1, 1], [], []>} : vector<128x128xf32>, vector<128x128xf32>, vector<128x128xf32> -> vector<128x128xf32>
    %c0_3 = arith.constant 0 : index
    %c0_4 = arith.constant 0 : index
    %3 = vector.load %arg3[%c0_3, %c0_4] : memref<1x128xf32, #tpu.memory_space<vmem>>, vector<1x128xf32>
    %4 = vector.broadcast %3 : vector<1x128xf32> to vector<128x128xf32>
    %5 = arith.addf %2, %4 : vector<128x128xf32>
    %cst_5 = arith.constant 0.000000e+00 : f32
    %6 = vector.broadcast %cst_5 : f32 to vector<128x128xf32>
    %7 = arith.maximumf %5, %6 : vector<128x128xf32>
    %8 = math.absf %5 : vector<128x128xf32>
    %cst_6 = arith.constant 0.000000e+00 : f32
    %9 = vector.broadcast %cst_6 : f32 to vector<128x128xf32>
    %10 = arith.subf %9, %8 : vector<128x128xf32>
    %11 = math.exp %10 : vector<128x128xf32>
    %12 = math.log1p %11 : vector<128x128xf32>
    %13 = arith.addf %7, %12 : vector<128x128xf32>
    %c0_7 = arith.constant 0 : index
    %c0_8 = arith.constant 0 : index
    %14 = vector.load %arg4[%c0_7, %c0_8] : memref<128x128xf32, #tpu.memory_space<vmem>>, vector<128x128xf32>
    %cst_9 = arith.constant dense<0.000000e+00> : vector<128x128xf32>
    %15 = tpu.matmul %13, %14, %cst_9 {dimension_numbers = #tpu.dot_dimension_numbers<[1], [0], [0], [1], [0, 0, 1, 1], [], []>} : vector<128x128xf32>, vector<128x128xf32>, vector<128x128xf32> -> vector<128x128xf32>
    %c0_10 = arith.constant 0 : index
    %c0_11 = arith.constant 0 : index
    %16 = vector.load %arg5[%c0_10, %c0_11] : memref<1x128xf32, #tpu.memory_space<vmem>>, vector<1x128xf32>
    %17 = vector.broadcast %16 : vector<1x128xf32> to vector<128x128xf32>
    %18 = arith.addf %15, %17 : vector<128x128xf32>
    %cst_12 = arith.constant 0.000000e+00 : f32
    %19 = vector.broadcast %cst_12 : f32 to vector<128x128xf32>
    %20 = arith.maximumf %18, %19 : vector<128x128xf32>
    %21 = math.absf %18 : vector<128x128xf32>
    %cst_13 = arith.constant 0.000000e+00 : f32
    %22 = vector.broadcast %cst_13 : f32 to vector<128x128xf32>
    %23 = arith.subf %22, %21 : vector<128x128xf32>
    %24 = math.exp %23 : vector<128x128xf32>
    %25 = math.log1p %24 : vector<128x128xf32>
    %26 = arith.addf %20, %25 : vector<128x128xf32>
    %c0_14 = arith.constant 0 : index
    %c0_15 = arith.constant 0 : index
    %27 = vector.load %arg6[%c0_14, %c0_15] : memref<128x128xf32, #tpu.memory_space<vmem>>, vector<128x128xf32>
    %cst_16 = arith.constant dense<0.000000e+00> : vector<128x128xf32>
    %28 = tpu.matmul %26, %27, %cst_16 {dimension_numbers = #tpu.dot_dimension_numbers<[1], [0], [0], [1], [0, 0, 1, 1], [], []>} : vector<128x128xf32>, vector<128x128xf32>, vector<128x128xf32> -> vector<128x128xf32>
    %c0_17 = arith.constant 0 : index
    %c0_18 = arith.constant 0 : index
    %29 = vector.load %arg7[%c0_17, %c0_18] : memref<1x128xf32, #tpu.memory_space<vmem>>, vector<1x128xf32>
    %30 = vector.broadcast %29 : vector<1x128xf32> to vector<128x128xf32>
    %31 = arith.addf %28, %30 : vector<128x128xf32>
    %cst_19 = arith.constant 0.000000e+00 : f32
    %32 = vector.broadcast %cst_19 : f32 to vector<128x128xf32>
    %33 = arith.maximumf %31, %32 : vector<128x128xf32>
    %34 = math.absf %31 : vector<128x128xf32>
    %cst_20 = arith.constant 0.000000e+00 : f32
    %35 = vector.broadcast %cst_20 : f32 to vector<128x128xf32>
    %36 = arith.subf %35, %34 : vector<128x128xf32>
    %37 = math.exp %36 : vector<128x128xf32>
    %38 = math.log1p %37 : vector<128x128xf32>
    %39 = arith.addf %33, %38 : vector<128x128xf32>
    %c0_21 = arith.constant 0 : index
    %c0_22 = arith.constant 0 : index
    %40 = vector.load %arg8[%c0_21, %c0_22] : memref<128x128xf32, #tpu.memory_space<vmem>>, vector<128x128xf32>
    tpu.vector_store %arg8[%c0_21, %c0_22], %39 {strides = array<i32>} : memref<128x128xf32, #tpu.memory_space<vmem>>, vector<128x128xf32>,
    return
  }
  func.func @transform_0(%arg0: i32) -> (i32, i32) {
    %c0_i32 = arith.constant 0 : i32
    %c0_i32_0 = arith.constant 0 : i32
    return %arg0, %c0_i32 : i32, i32
  }
  func.func @transform_1(%arg0: i32) -> (i32, i32) {
    %c0_i32 = arith.constant 0 : i32
    %c0_i32_0 = arith.constant 0 : i32
    %c0_i32_1 = arith.constant 0 : i32
    return %c0_i32, %c0_i32_0 : i32, i32
  }
  func.func @transform_2(%arg0: i32) -> (i32, i32) {
    %c0_i32 = arith.constant 0 : i32
    %c0_i32_0 = arith.constant 0 : i32
    %c0_i32_1 = arith.constant 0 : i32
    return %c0_i32, %c0_i32_0 : i32, i32
  }
  func.func @transform_3(%arg0: i32) -> (i32, i32) {
    %c0_i32 = arith.constant 0 : i32
    %c0_i32_0 = arith.constant 0 : i32
    %c0_i32_1 = arith.constant 0 : i32
    return %c0_i32, %c0_i32_0 : i32, i32
  }
  func.func @transform_4(%arg0: i32) -> (i32, i32) {
    %c0_i32 = arith.constant 0 : i32
    %c0_i32_0 = arith.constant 0 : i32
    %c0_i32_1 = arith.constant 0 : i32
    return %c0_i32, %c0_i32_0 : i32, i32
  }
  func.func @transform_5(%arg0: i32) -> (i32, i32) {
    %c0_i32 = arith.constant 0 : i32
    %c0_i32_0 = arith.constant 0 : i32
    %c0_i32_1 = arith.constant 0 : i32
    return %c0_i32, %c0_i32_0 : i32, i32
  }
  func.func @transform_6(%arg0: i32) -> (i32, i32) {
    %c0_i32 = arith.constant 0 : i32
    %c0_i32_0 = arith.constant 0 : i32
    %c0_i32_1 = arith.constant 0 : i32
    return %c0_i32, %c0_i32_0 : i32, i32
  }
  func.func @transform_7(%arg0: i32) -> (i32, i32) {
    %c0_i32 = arith.constant 0 : i32
    %c0_i32_0 = arith.constant 0 : i32
    return %arg0, %c0_i32 : i32, i32
  }
}

</mosaic_0001>

<llo_original>
// kernel: tpu_custom_call.1
$region0: #{tpu_custom_call.1}
  #allocation0 [shape = 'u32[]', space=smem, size = 0x4, offset = 0x4, fixed_abs, tag = 'smem constant byte address 0x4 - core index']
  #allocation1 [shape = 'u32[72,128]{1,0:T(1,128)}', space=vmem, size = 0x9000, scoped, tag = 'internal scratch']
  %s0 = inlined_call_operand.hbm [shape: f32[128,128], index: 0, kind: input, shape index: {}]
  %s1 = inlined_call_operand.hbm [shape: f32[128,128], index: 1, kind: input, shape index: {}]
  %s2 = inlined_call_operand.vmem [shape: f32[1,128], index: 2, kind: input, shape index: {}]
  %s3 = inlined_call_operand.hbm [shape: f32[128,128], index: 3, kind: input, shape index: {}]
  %s4 = inlined_call_operand.vmem [shape: f32[1,128], index: 4, kind: input, shape index: {}]
  %s5 = inlined_call_operand.hbm [shape: f32[128,128], index: 5, kind: input, shape index: {}]
  %s6 = inlined_call_operand.vmem [shape: f32[1,128], index: 6, kind: input, shape index: {}]
  %s7 = inlined_call_operand.hbm [shape: f32[128,128], index: 7, kind: output, shape index: {}]
  %s8 = sld [smem:[#allocation0]]
  $region54: #{tpu_custom_call.1} parent=0
    _
  %s10 = ssub.s32 1, %s8
  %s11 = scalar_select 0, %s10, %s8
  $region1: #{tpu_custom_call.1} parent=0
    #allocation2 [shape = 'u8[65536]{0}', space=vmem, size = 0x10000, scoped, tag = 'input window, operand 0, single buffered']
    #allocation3 [shape = 's32[1]{0}', space=sflag, size = 0x4, scoped, tag = 'scoped memory for tpu_custom_call.1']
    #allocation4 [shape = 's32[1]{0}', space=sflag, size = 0x4, scoped, tag = 'scoped memory for tpu_custom_call.1']
    #allocation5 [shape = 'u8[65536]{0}', space=vmem, size = 0x10000, scoped, tag = 'input window, operand 1, single buffered']
    #allocation6 [shape = 's32[1]{0}', space=sflag, size = 0x4, scoped, tag = 'scoped memory for tpu_custom_call.1']
    #allocation7 [shape = 'u8[65536]{0}', space=vmem, size = 0x10000, scoped, tag = 'input window, operand 3, single buffered']
    #allocation8 [shape = 'u8[65536]{0}', space=vmem, size = 0x10000, scoped, tag = 'input window, operand 5, single buffered']
    #allocation9 [shape = 's32[1]{0}', space=sflag, size = 0x4, scoped, tag = 'scoped memory for tpu_custom_call.1']
    #allocation10 [shape = 'u8[65536]{0}', space=vmem, size = 0x10000, scoped, tag = 'output window, operand 0, single buffered']
    %12 = vsyncpa [#allocation3], 0
    %13 = vsyncpa [#allocation6], 0
    %14 = vsyncpa [#allocation9], 0
    %15 = vsyncpa [#allocation4], 0
    // Predicated region
    $region2: #{tpu_custom_call.1} parent=1 // pred_check
      _
    $region3: #{tpu_custom_call.1} parent=1 // pred_check_branch
      %17 = sbr.rel (0) target = $region5
    $region4: #{tpu_custom_call.1} parent=1 // pred_region
      %19 = vsyncadd [#allocation3], 0
      %s20 = sshll.u32 %s0, 4
      %s21 = int_to_ptr.hbm [resolvable:$true] %s20
      %s22 = sshll.u32 [#allocation2], 4
      %s23 = int_to_ptr.vmem [resolvable:$true] %s22
      %28 = dma.hbm_to_vmem [thread:$0]  %s21, 2048, %s23, [#allocation3], 128, 128, 8
    $region5: #{tpu_custom_call.1} parent=1 // pred_fallthru
      _
    // Predicated region
    $region6: #{tpu_custom_call.1} parent=1 // pred_check
      _
    $region7: #{tpu_custom_call.1} parent=1 // pred_check_branch
      %30 = sbr.rel (0) target = $region9
    $region8: #{tpu_custom_call.1} parent=1 // pred_region
      %32 = vsyncadd [#allocation6], 0
      %s33 = sshll.u32 %s1, 4
      %s34 = int_to_ptr.hbm [resolvable:$true] %s33
      %s35 = sshll.u32 [#allocation5], 4
      %s36 = int_to_ptr.vmem [resolvable:$true] %s35
      %41 = dma.hbm_to_vmem [thread:$0]  %s34, 2048, %s36, [#allocation6], 128, 128, 8
    $region9: #{tpu_custom_call.1} parent=1 // pred_fallthru
      _
    // Predicated region
    $region10: #{tpu_custom_call.1} parent=1 // pred_check
      _
    $region11: #{tpu_custom_call.1} parent=1 // pred_check_branch
      %43 = sbr.rel (0) target = $region13
    $region12: #{tpu_custom_call.1} parent=1 // pred_region
      _
    $region13: #{tpu_custom_call.1} parent=1 // pred_fallthru
      _
    // Predicated region
    $region14: #{tpu_custom_call.1} parent=1 // pred_check
      _
    $region15: #{tpu_custom_call.1} parent=1 // pred_check_branch
      %45 = sbr.rel (0) target = $region17
    $region16: #{tpu_custom_call.1} parent=1 // pred_region
      %47 = vsyncadd [#allocation6], 0
      %s48 = sshll.u32 %s3, 4
      %s49 = int_to_ptr.hbm [resolvable:$true] %s48
      %s50 = sshll.u32 [#allocation7], 4
      %s51 = int_to_ptr.vmem [resolvable:$true] %s50
      %56 = dma.hbm_to_vmem [thread:$0]  %s49, 2048, %s51, [#allocation6], 128, 128, 8
    $region17: #{tpu_custom_call.1} parent=1 // pred_fallthru
      _
    // Predicated region
    $region18: #{tpu_custom_call.1} parent=1 // pred_check
      _
    $region19: #{tpu_custom_call.1} parent=1 // pred_check_branch
      %58 = sbr.rel (0) target = $region21
    $region20: #{tpu_custom_call.1} parent=1 // pred_region
      _
    $region21: #{tpu_custom_call.1} parent=1 // pred_fallthru
      _
    // Predicated region
    $region22: #{tpu_custom_call.1} parent=1 // pred_check
      _
    $region23: #{tpu_custom_call.1} parent=1 // pred_check_branch
      %60 = sbr.rel (0) target = $region25
    $region24: #{tpu_custom_call.1} parent=1 // pred_region
      %62 = vsyncadd [#allocation9], 0
      %s63 = sshll.u32 %s5, 4
      %s64 = int_to_ptr.hbm [resolvable:$true] %s63
      %s65 = sshll.u32 [#allocation8], 4
      %s66 = int_to_ptr.vmem [resolvable:$true] %s65
      %71 = dma.hbm_to_vmem [thread:$0]  %s64, 2048, %s66, [#allocation9], 128, 128, 8
    $region25: #{tpu_custom_call.1} parent=1 // pred_fallthru
      _
    // Predicated region
    $region26: #{tpu_custom_call.1} parent=1 // pred_check
      _
    $region27: #{tpu_custom_call.1} parent=1 // pred_check_branch
      %73 = sbr.rel (0) target = $region29
    $region28: #{tpu_custom_call.1} parent=1 // pred_region
      _
    $region29: #{tpu_custom_call.1} parent=1 // pred_fallthru
      _
    // Predicated region
    $region30: #{tpu_custom_call.1} parent=1 // pred_check
      _
    $region31: #{tpu_custom_call.1} parent=1 // pred_check_branch
      %75 = sbr.rel (0) target = $region33
    $region32: #{tpu_custom_call.1} parent=1 // pred_region
      %77 = dma.done [#allocation3], 2048
    $region33: #{tpu_custom_call.1} parent=1 // pred_fallthru
      _
    // Predicated region
    $region34: #{tpu_custom_call.1} parent=1 // pred_check
      _
    $region35: #{tpu_custom_call.1} parent=1 // pred_check_branch
      %79 = sbr.rel (0) target = $region37
    $region36: #{tpu_custom_call.1} parent=1 // pred_region
      %81 = dma.done [#allocation6], 2048
    $region37: #{tpu_custom_call.1} parent=1 // pred_fallthru
      _
    // Predicated region
    $region38: #{tpu_custom_call.1} parent=1 // pred_check
      _
    $region39: #{tpu_custom_call.1} parent=1 // pred_check_branch
      %83 = sbr.rel (0) target = $region41
    $region40: #{tpu_custom_call.1} parent=1 // pred_region
      %85 = dma.done [#allocation6], 2048
    $region41: #{tpu_custom_call.1} parent=1 // pred_fallthru
      _
    // Predicated region
    $region42: #{tpu_custom_call.1} parent=1 // pred_check
      _
    $region43: #{tpu_custom_call.1} parent=1 // pred_check_branch
      %87 = sbr.rel (0) target = $region45
    $region44: #{tpu_custom_call.1} parent=1 // pred_region
      %89 = dma.done [#allocation9], 2048
    $region45: #{tpu_custom_call.1} parent=1 // pred_fallthru
      _
    %v90 = vld [vmem:[#allocation2] sm:$0xff]
    %v91 = vld [vmem:[#allocation2 + $0x8] sm:$0xff]
    %v92 = vld [vmem:[#allocation2 + $0x10] sm:$0xff]
    %v93 = vld [vmem:[#allocation2 + $0x18] sm:$0xff]
    %v94 = vld [vmem:[#allocation2 + $0x20] sm:$0xff]
    %v95 = vld [vmem:[#allocation2 + $0x28] sm:$0xff]
    %v96 = vld [vmem:[#allocation2 + $0x30] sm:$0xff]
    %v97 = vld [vmem:[#allocation2 + $0x38] sm:$0xff]
    %v98 = vld [vmem:[#allocation2 + $0x40] sm:$0xff]
    %v99 = vld [vmem:[#allocation2 + $0x48] sm:$0xff]
    %v100 = vld [vmem:[#allocation2 + $0x50] sm:$0xff]
    %v101 = vld [vmem:[#allocation2 + $0x58] sm:$0xff]
    %v102 = vld [vmem:[#allocation2 + $0x60] sm:$0xff]
    %v103 = vld [vmem:[#allocation2 + $0x68] sm:$0xff]
    %v104 = vld [vmem:[#allocation2 + $0x70] sm:$0xff]
    %v105 = vld [vmem:[#allocation2 + $0x78] sm:$0xff]
    %v106 = vld [vmem:[#allocation5] sm:$0xff]
    %v107 = vld [vmem:[#allocation5 + $0x8] sm:$0xff]
    %v108 = vld [vmem:[#allocation5 + $0x10] sm:$0xff]
    %v109 = vld [vmem:[#allocation5 + $0x18] sm:$0xff]
    %v110 = vld [vmem:[#allocation5 + $0x20] sm:$0xff]
    %v111 = vld [vmem:[#allocation5 + $0x28] sm:$0xff]
    %v112 = vld [vmem:[#allocation5 + $0x30] sm:$0xff]
    %v113 = vld [vmem:[#allocation5 + $0x38] sm:$0xff]
    %v114 = vld [vmem:[#allocation5 + $0x40] sm:$0xff]
    %v115 = vld [vmem:[#allocation5 + $0x48] sm:$0xff]
    %v116 = vld [vmem:[#allocation5 + $0x50] sm:$0xff]
    %v117 = vld [vmem:[#allocation5 + $0x58] sm:$0xff]
    %v118 = vld [vmem:[#allocation5 + $0x60] sm:$0xff]
    %v119 = vld [vmem:[#allocation5 + $0x68] sm:$0xff]
    %v120 = vld [vmem:[#allocation5 + $0x70] sm:$0xff]
    %v121 = vld [vmem:[#allocation5 + $0x78] sm:$0xff]
    %v122 = vld [vmem:[%s2] sm:$0x1]
    %v124 = vperm.slane %v122, 0
    %126 = vmatpush.msra.mxu0 %v121
    %127 = vmatpush.msra.mxu0 %v120
    %128 = vmatpush.msra.mxu0 %v119
    %129 = vmatpush.msra.mxu0 %v118
    %130 = vmatpush.msra.mxu0 %v117
    %131 = vmatpush.msra.mxu0 %v116
    %132 = vmatpush.msra.mxu0 %v115
    %133 = vmatpush.msra.mxu0 %v114
    %134 = vmatpush.msra.mxu0 %v113
    %135 = vmatpush.msra.mxu0 %v112
    %136 = vmatpush.msra.mxu0 %v111
    %137 = vmatpush.msra.mxu0 %v110
    %138 = vmatpush.msra.mxu0 %v109
    %139 = vmatpush.msra.mxu0 %v108
    %140 = vmatpush.msra.mxu0 %v107
    %141 = vmatpush.msra.mxu0 %v106
    %142 = vmatmul.f32.gmra.mxu0 %v90
    %v143 = vpop.f32.mrf.mxu0
    %v144 = vadd.f32 %v124, %v143
    %145 = vmatmul.f32.gmra.mxu0 %v91
    %v146 = vpop.f32.mrf.mxu0
    %v147 = vadd.f32 %v124, %v146
    %148 = vmatmul.f32.gmra.mxu0 %v92
    %v149 = vpop.f32.mrf.mxu0
    %v150 = vadd.f32 %v124, %v149
    %151 = vmatmul.f32.gmra.mxu0 %v93
    %v152 = vpop.f32.mrf.mxu0
    %v153 = vadd.f32 %v124, %v152
    %154 = vmatmul.f32.gmra.mxu0 %v94
    %v155 = vpop.f32.mrf.mxu0
    %v156 = vadd.f32 %v124, %v155
    %157 = vmatmul.f32.gmra.mxu0 %v95
    %v158 = vpop.f32.mrf.mxu0
    %v159 = vadd.f32 %v124, %v158
    %160 = vmatmul.f32.gmra.mxu0 %v96
    %v161 = vpop.f32.mrf.mxu0
    %v162 = vadd.f32 %v124, %v161
    %163 = vmatmul.f32.gmra.mxu0 %v97
    %v164 = vpop.f32.mrf.mxu0
    %v165 = vadd.f32 %v124, %v164
    %166 = vmatmul.f32.gmra.mxu0 %v98
    %v167 = vpop.f32.mrf.mxu0
    %v168 = vadd.f32 %v124, %v167
    %169 = vmatmul.f32.gmra.mxu0 %v99
    %v170 = vpop.f32.mrf.mxu0
    %v171 = vadd.f32 %v124, %v170
    %172 = vmatmul.f32.gmra.mxu0 %v100
    %v173 = vpop.f32.mrf.mxu0
    %v174 = vadd.f32 %v124, %v173
    %175 = vmatmul.f32.gmra.mxu0 %v101
    %v176 = vpop.f32.mrf.mxu0
    %v177 = vadd.f32 %v124, %v176
    %178 = vmatmul.f32.gmra.mxu0 %v102
    %v179 = vpop.f32.mrf.mxu0
    %v180 = vadd.f32 %v124, %v179
    %181 = vmatmul.f32.gmra.mxu0 %v103
    %v182 = vpop.f32.mrf.mxu0
    %v183 = vadd.f32 %v124, %v182
    %184 = vmatmul.f32.gmra.mxu0 %v104
    %v185 = vpop.f32.mrf.mxu0
    %v186 = vadd.f32 %v124, %v185
    %187 = vmatmul.f32.gmra.mxu0 %v105
    %v188 = vpop.f32.mrf.mxu0
    %v189 = vadd.f32 %v124, %v188
    %190 = vdwg.mxu0
    %v191 = vmax.f32 %v144, 0.0
    %v192 = vmax.f32 %v147, 0.0
    %v193 = vmax.f32 %v150, 0.0
    %v194 = vmax.f32 %v153, 0.0
    %v195 = vmax.f32 %v156, 0.0
    %v196 = vmax.f32 %v159, 0.0
    %v197 = vmax.f32 %v162, 0.0
    %v198 = vmax.f32 %v165, 0.0
    %v199 = vmax.f32 %v168, 0.0
    %v200 = vmax.f32 %v171, 0.0
    %v201 = vmax.f32 %v174, 0.0
    %v202 = vmax.f32 %v177, 0.0
    %v203 = vmax.f32 %v180, 0.0
    %v204 = vmax.f32 %v183, 0.0
    %v205 = vmax.f32 %v186, 0.0
    %v206 = vmax.f32 %v189, 0.0
    %v207 = vand.u32 2147483647, %v144
    %v208 = vand.u32 2147483647, %v147
    %v209 = vand.u32 2147483647, %v150
    %v210 = vand.u32 2147483647, %v153
    %v211 = vand.u32 2147483647, %v156
    %v212 = vand.u32 2147483647, %v159
    %v213 = vand.u32 2147483647, %v162
    %v214 = vand.u32 2147483647, %v165
    %v215 = vand.u32 2147483647, %v168
    %v216 = vand.u32 2147483647, %v171
    %v217 = vand.u32 2147483647, %v174
    %v218 = vand.u32 2147483647, %v177
    %v219 = vand.u32 2147483647, %v180
    %v220 = vand.u32 2147483647, %v183
    %v221 = vand.u32 2147483647, %v186
    %v222 = vand.u32 2147483647, %v189
    %v223 = vsub.f32 0.0, %v207
    %v224 = vsub.f32 0.0, %v208
    %v225 = vsub.f32 0.0, %v209
    %v226 = vsub.f32 0.0, %v210
    %v227 = vsub.f32 0.0, %v211
    %v228 = vsub.f32 0.0, %v212
    %v229 = vsub.f32 0.0, %v213
    %v230 = vsub.f32 0.0, %v214
    %v231 = vsub.f32 0.0, %v215
    %v232 = vsub.f32 0.0, %v216
    %v233 = vsub.f32 0.0, %v217
    %v234 = vsub.f32 0.0, %v218
    %v235 = vsub.f32 0.0, %v219
    %v236 = vsub.f32 0.0, %v220
    %v237 = vsub.f32 0.0, %v221
    %v238 = vsub.f32 0.0, %v222
    %v239 = vmul.f32 %v223, 1.442695
    %v240 = vpow.pop %v239
    %v241 = vmul.f32 %v224, 1.442695
    %v242 = vpow.pop %v241
    %v243 = vmul.f32 %v225, 1.442695
    %v244 = vpow.pop %v243
    %v245 = vmul.f32 %v226, 1.442695
    %v246 = vpow.pop %v245
    %v247 = vmul.f32 %v227, 1.442695
    %v248 = vpow.pop %v247
    %v249 = vmul.f32 %v228, 1.442695
    %v250 = vpow.pop %v249
    %v251 = vmul.f32 %v229, 1.442695
    %v252 = vpow.pop %v251
    %v253 = vmul.f32 %v230, 1.442695
    %v254 = vpow.pop %v253
    %v255 = vmul.f32 %v231, 1.442695
    %v256 = vpow.pop %v255
    %v257 = vmul.f32 %v232, 1.442695
    %v258 = vpow.pop %v257
    %v259 = vmul.f32 %v233, 1.442695
    %v260 = vpow.pop %v259
    %v261 = vmul.f32 %v234, 1.442695
    %v262 = vpow.pop %v261
    %v263 = vmul.f32 %v235, 1.442695
    %v264 = vpow.pop %v263
    %v265 = vmul.f32 %v236, 1.442695
    %v266 = vpow.pop %v265
    %v267 = vmul.f32 %v237, 1.442695
    %v268 = vpow.pop %v267
    %v269 = vmul.f32 %v238, 1.442695
    %v270 = vpow.pop %v269
    %v271 = vadd.f32 %v240, 1.0
    %v272 = vlog2.pop %v271
    %v273 = vmul.f32 %v272, 0.6931472
    %v274 = vmul.f32 -0.5, %v240
    %v275 = vadd.f32 %v274, 1.0
    %v276 = vmul.f32 %v275, %v240
    %v277 = vand.u32 2147483647, %v240
    %vm278 = vcmp.lt.f32.partialorder %v277, 0.0004427343
    %v279 = vsel %vm278, %v276, %v273
    %v280 = vadd.f32 %v242, 1.0
    %v281 = vlog2.pop %v280
    %v282 = vmul.f32 %v281, 0.6931472
    %v283 = vmul.f32 -0.5, %v242
    %v284 = vadd.f32 %v283, 1.0
    %v285 = vmul.f32 %v284, %v242
    %v286 = vand.u32 2147483647, %v242
    %vm287 = vcmp.lt.f32.partialorder %v286, 0.0004427343
    %v288 = vsel %vm287, %v285, %v282
    %v289 = vadd.f32 %v244, 1.0
    %v290 = vlog2.pop %v289
    %v291 = vmul.f32 %v290, 0.6931472
    %v292 = vmul.f32 -0.5, %v244
    %v293 = vadd.f32 %v292, 1.0
    %v294 = vmul.f32 %v293, %v244
    %v295 = vand.u32 2147483647, %v244
    %vm296 = vcmp.lt.f32.partialorder %v295, 0.0004427343
    %v297 = vsel %vm296, %v294, %v291
    %v298 = vadd.f32 %v246, 1.0
    %v299 = vlog2.pop %v298
    %v300 = vmul.f32 %v299, 0.6931472
    %v301 = vmul.f32 -0.5, %v246
    %v302 = vadd.f32 %v301, 1.0
    %v303 = vmul.f32 %v302, %v246
    %v304 = vand.u32 2147483647, %v246
    %vm305 = vcmp.lt.f32.partialorder %v304, 0.0004427343
    %v306 = vsel %vm305, %v303, %v300
    %v307 = vadd.f32 %v248, 1.0
    %v308 = vlog2.pop %v307
    %v309 = vmul.f32 %v308, 0.6931472
    %v310 = vmul.f32 -0.5, %v248
    %v311 = vadd.f32 %v310, 1.0
    %v312 = vmul.f32 %v311, %v248
    %v313 = vand.u32 2147483647, %v248
    %vm314 = vcmp.lt.f32.partialorder %v313, 0.0004427343
    %v315 = vsel %vm314, %v312, %v309
    %v316 = vadd.f32 %v250, 1.0
    %v317 = vlog2.pop %v316
    %v318 = vmul.f32 %v317, 0.6931472
    %v319 = vmul.f32 -0.5, %v250
    %v320 = vadd.f32 %v319, 1.0
    %v321 = vmul.f32 %v320, %v250
    %v322 = vand.u32 2147483647, %v250
    %vm323 = vcmp.lt.f32.partialorder %v322, 0.0004427343
    %v324 = vsel %vm323, %v321, %v318
    %v325 = vadd.f32 %v252, 1.0
    %v326 = vlog2.pop %v325
    %v327 = vmul.f32 %v326, 0.6931472
    %v328 = vmul.f32 -0.5, %v252
    %v329 = vadd.f32 %v328, 1.0
    %v330 = vmul.f32 %v329, %v252
    %v331 = vand.u32 2147483647, %v252
    %vm332 = vcmp.lt.f32.partialorder %v331, 0.0004427343
    %v333 = vsel %vm332, %v330, %v327
    %v334 = vadd.f32 %v254, 1.0
    %v335 = vlog2.pop %v334
    %v336 = vmul.f32 %v335, 0.6931472
    %v337 = vmul.f32 -0.5, %v254
    %v338 = vadd.f32 %v337, 1.0
    %v339 = vmul.f32 %v338, %v254
    %v340 = vand.u32 2147483647, %v254
    %vm341 = vcmp.lt.f32.partialorder %v340, 0.0004427343
    %v342 = vsel %vm341, %v339, %v336
    %v343 = vadd.f32 %v256, 1.0
    %v344 = vlog2.pop %v343
    %v345 = vmul.f32 %v344, 0.6931472
    %v346 = vmul.f32 -0.5, %v256
    %v347 = vadd.f32 %v346, 1.0
    %v348 = vmul.f32 %v347, %v256
    %v349 = vand.u32 2147483647, %v256
    %vm350 = vcmp.lt.f32.partialorder %v349, 0.0004427343
    %v351 = vsel %vm350, %v348, %v345
    %v352 = vadd.f32 %v258, 1.0
    %v353 = vlog2.pop %v352
    %v354 = vmul.f32 %v353, 0.6931472
    %v355 = vmul.f32 -0.5, %v258
    %v356 = vadd.f32 %v355, 1.0
    %v357 = vmul.f32 %v356, %v258
    %v358 = vand.u32 2147483647, %v258
    %vm359 = vcmp.lt.f32.partialorder %v358, 0.0004427343
    %v360 = vsel %vm359, %v357, %v354
    %v361 = vadd.f32 %v260, 1.0
    %v362 = vlog2.pop %v361
    %v363 = vmul.f32 %v362, 0.6931472
    %v364 = vmul.f32 -0.5, %v260
    %v365 = vadd.f32 %v364, 1.0
    %v366 = vmul.f32 %v365, %v260
    %v367 = vand.u32 2147483647, %v260
    %vm368 = vcmp.lt.f32.partialorder %v367, 0.0004427343
    %v369 = vsel %vm368, %v366, %v363
    %v370 = vadd.f32 %v262, 1.0
    %v371 = vlog2.pop %v370
    %v372 = vmul.f32 %v371, 0.6931472
    %v373 = vmul.f32 -0.5, %v262
    %v374 = vadd.f32 %v373, 1.0
    %v375 = vmul.f32 %v374, %v262
    %v376 = vand.u32 2147483647, %v262
    %vm377 = vcmp.lt.f32.partialorder %v376, 0.0004427343
    %v378 = vsel %vm377, %v375, %v372
    %v379 = vadd.f32 %v264, 1.0
    %v380 = vlog2.pop %v379
    %v381 = vmul.f32 %v380, 0.6931472
    %v382 = vmul.f32 -0.5, %v264
    %v383 = vadd.f32 %v382, 1.0
    %v384 = vmul.f32 %v383, %v264
    %v385 = vand.u32 2147483647, %v264
    %vm386 = vcmp.lt.f32.partialorder %v385, 0.0004427343
    %v387 = vsel %vm386, %v384, %v381
    %v388 = vadd.f32 %v266, 1.0
    %v389 = vlog2.pop %v388
    %v390 = vmul.f32 %v389, 0.6931472
    %v391 = vmul.f32 -0.5, %v266
    %v392 = vadd.f32 %v391, 1.0
    %v393 = vmul.f32 %v392, %v266
    %v394 = vand.u32 2147483647, %v266
    %vm395 = vcmp.lt.f32.partialorder %v394, 0.0004427343
    %v396 = vsel %vm395, %v393, %v390
    %v397 = vadd.f32 %v268, 1.0
    %v398 = vlog2.pop %v397
    %v399 = vmul.f32 %v398, 0.6931472
    %v400 = vmul.f32 -0.5, %v268
    %v401 = vadd.f32 %v400, 1.0
    %v402 = vmul.f32 %v401, %v268
    %v403 = vand.u32 2147483647, %v268
    %vm404 = vcmp.lt.f32.partialorder %v403, 0.0004427343
    %v405 = vsel %vm404, %v402, %v399
    %v406 = vadd.f32 %v270, 1.0
    %v407 = vlog2.pop %v406
    %v408 = vmul.f32 %v407, 0.6931472
    %v409 = vmul.f32 -0.5, %v270
    %v410 = vadd.f32 %v409, 1.0
    %v411 = vmul.f32 %v410, %v270
    %v412 = vand.u32 2147483647, %v270
    %vm413 = vcmp.lt.f32.partialorder %v412, 0.0004427343
    %v414 = vsel %vm413, %v411, %v408
    %v415 = vadd.f32 %v191, %v279
    %v416 = vadd.f32 %v192, %v288
    %v417 = vadd.f32 %v193, %v297
    %v418 = vadd.f32 %v194, %v306
    %v419 = vadd.f32 %v195, %v315
    %v420 = vadd.f32 %v196, %v324
    %v421 = vadd.f32 %v197, %v333
    %v422 = vadd.f32 %v198, %v342
    %v423 = vadd.f32 %v199, %v351
    %v424 = vadd.f32 %v200, %v360
    %v425 = vadd.f32 %v201, %v369
    %v426 = vadd.f32 %v202, %v378
    %v427 = vadd.f32 %v203, %v387
    %v428 = vadd.f32 %v204, %v396
    %v429 = vadd.f32 %v205, %v405
    %v430 = vadd.f32 %v206, %v414
    %v431 = vld [vmem:[#allocation7] sm:$0xff]
    %v432 = vld [vmem:[#allocation7 + $0x8] sm:$0xff]
    %v433 = vld [vmem:[#allocation7 + $0x10] sm:$0xff]
    %v434 = vld [vmem:[#allocation7 + $0x18] sm:$0xff]
    %v435 = vld [vmem:[#allocation7 + $0x20] sm:$0xff]
    %v436 = vld [vmem:[#allocation7 + $0x28] sm:$0xff]
    %v437 = vld [vmem:[#allocation7 + $0x30] sm:$0xff]
    %v438 = vld [vmem:[#allocation7 + $0x38] sm:$0xff]
    %v439 = vld [vmem:[#allocation7 + $0x40] sm:$0xff]
    %v440 = vld [vmem:[#allocation7 + $0x48] sm:$0xff]
    %v441 = vld [vmem:[#allocation7 + $0x50] sm:$0xff]
    %v442 = vld [vmem:[#allocation7 + $0x58] sm:$0xff]
    %v443 = vld [vmem:[#allocation7 + $0x60] sm:$0xff]
    %v444 = vld [vmem:[#allocation7 + $0x68] sm:$0xff]
    %v445 = vld [vmem:[#allocation7 + $0x70] sm:$0xff]
    %v446 = vld [vmem:[#allocation7 + $0x78] sm:$0xff]
    %v447 = vld [vmem:[%s4] sm:$0x1]
    %v449 = vperm.slane %v447, 0
    %451 = vmatpush.msra.mxu0 %v446
    %452 = vmatpush.msra.mxu0 %v445
    %453 = vmatpush.msra.mxu0 %v444
    %454 = vmatpush.msra.mxu0 %v443
    %455 = vmatpush.msra.mxu0 %v442
    %456 = vmatpush.msra.mxu0 %v441
    %457 = vmatpush.msra.mxu0 %v440
    %458 = vmatpush.msra.mxu0 %v439
    %459 = vmatpush.msra.mxu0 %v438
    %460 = vmatpush.msra.mxu0 %v437
    %461 = vmatpush.msra.mxu0 %v436
    %462 = vmatpush.msra.mxu0 %v435
    %463 = vmatpush.msra.mxu0 %v434
    %464 = vmatpush.msra.mxu0 %v433
    %465 = vmatpush.msra.mxu0 %v432
    %466 = vmatpush.msra.mxu0 %v431
    %467 = vmatmul.f32.gmra.mxu0 %v415
    %v468 = vpop.f32.mrf.mxu0
    %v469 = vadd.f32 %v449, %v468
    %470 = vmatmul.f32.gmra.mxu0 %v416
    %v471 = vpop.f32.mrf.mxu0
    %v472 = vadd.f32 %v449, %v471
    %473 = vmatmul.f32.gmra.mxu0 %v417
    %v474 = vpop.f32.mrf.mxu0
    %v475 = vadd.f32 %v449, %v474
    %476 = vmatmul.f32.gmra.mxu0 %v418
    %v477 = vpop.f32.mrf.mxu0
    %v478 = vadd.f32 %v449, %v477
    %479 = vmatmul.f32.gmra.mxu0 %v419
    %v480 = vpop.f32.mrf.mxu0
    %v481 = vadd.f32 %v449, %v480
    %482 = vmatmul.f32.gmra.mxu0 %v420
    %v483 = vpop.f32.mrf.mxu0
    %v484 = vadd.f32 %v449, %v483
    %485 = vmatmul.f32.gmra.mxu0 %v421
    %v486 = vpop.f32.mrf.mxu0
    %v487 = vadd.f32 %v449, %v486
    %488 = vmatmul.f32.gmra.mxu0 %v422
    %v489 = vpop.f32.mrf.mxu0
    %v490 = vadd.f32 %v449, %v489
    %491 = vmatmul.f32.gmra.mxu0 %v423
    %v492 = vpop.f32.mrf.mxu0
    %v493 = vadd.f32 %v449, %v492
    %494 = vmatmul.f32.gmra.mxu0 %v424
    %v495 = vpop.f32.mrf.mxu0
    %v496 = vadd.f32 %v449, %v495
    %497 = vmatmul.f32.gmra.mxu0 %v425
    %v498 = vpop.f32.mrf.mxu0
    %v499 = vadd.f32 %v449, %v498
    %500 = vmatmul.f32.gmra.mxu0 %v426
    %v501 = vpop.f32.mrf.mxu0
    %v502 = vadd.f32 %v449, %v501
    %503 = vmatmul.f32.gmra.mxu0 %v427
    %v504 = vpop.f32.mrf.mxu0
    %v505 = vadd.f32 %v449, %v504
    %506 = vmatmul.f32.gmra.mxu0 %v428
    %v507 = vpop.f32.mrf.mxu0
    %v508 = vadd.f32 %v449, %v507
    %509 = vmatmul.f32.gmra.mxu0 %v429
    %v510 = vpop.f32.mrf.mxu0
    %v511 = vadd.f32 %v449, %v510
    %512 = vmatmul.f32.gmra.mxu0 %v430
    %v513 = vpop.f32.mrf.mxu0
    %v514 = vadd.f32 %v449, %v513
    %515 = vdwg.mxu0
    %v516 = vmax.f32 %v469, 0.0
    %v517 = vmax.f32 %v472, 0.0
    %v518 = vmax.f32 %v475, 0.0
    %v519 = vmax.f32 %v478, 0.0
    %v520 = vmax.f32 %v481, 0.0
    %v521 = vmax.f32 %v484, 0.0
    %v522 = vmax.f32 %v487, 0.0
    %v523 = vmax.f32 %v490, 0.0
    %v524 = vmax.f32 %v493, 0.0
    %v525 = vmax.f32 %v496, 0.0
    %v526 = vmax.f32 %v499, 0.0
    %v527 = vmax.f32 %v502, 0.0
    %v528 = vmax.f32 %v505, 0.0
    %v529 = vmax.f32 %v508, 0.0
    %v530 = vmax.f32 %v511, 0.0
    %v531 = vmax.f32 %v514, 0.0
    %v532 = vand.u32 2147483647, %v469
    %v533 = vand.u32 2147483647, %v472
    %v534 = vand.u32 2147483647, %v475
    %v535 = vand.u32 2147483647, %v478
    %v536 = vand.u32 2147483647, %v481
    %v537 = vand.u32 2147483647, %v484
    %v538 = vand.u32 2147483647, %v487
    %v539 = vand.u32 2147483647, %v490
    %v540 = vand.u32 2147483647, %v493
    %v541 = vand.u32 2147483647, %v496
    %v542 = vand.u32 2147483647, %v499
    %v543 = vand.u32 2147483647, %v502
    %v544 = vand.u32 2147483647, %v505
    %v545 = vand.u32 2147483647, %v508
    %v546 = vand.u32 2147483647, %v511
    %v547 = vand.u32 2147483647, %v514
    %v548 = vsub.f32 0.0, %v532
    %v549 = vsub.f32 0.0, %v533
    %v550 = vsub.f32 0.0, %v534
    %v551 = vsub.f32 0.0, %v535
    %v552 = vsub.f32 0.0, %v536
    %v553 = vsub.f32 0.0, %v537
    %v554 = vsub.f32 0.0, %v538
    %v555 = vsub.f32 0.0, %v539
    %v556 = vsub.f32 0.0, %v540
    %v557 = vsub.f32 0.0, %v541
    %v558 = vsub.f32 0.0, %v542
    %v559 = vsub.f32 0.0, %v543
    %v560 = vsub.f32 0.0, %v544
    %v561 = vsub.f32 0.0, %v545
    %v562 = vsub.f32 0.0, %v546
    %v563 = vsub.f32 0.0, %v547
    %v564 = vmul.f32 %v548, 1.442695
    %v565 = vpow.pop %v564
    %v566 = vmul.f32 %v549, 1.442695
    %v567 = vpow.pop %v566
    %v568 = vmul.f32 %v550, 1.442695
    %v569 = vpow.pop %v568
    %v570 = vmul.f32 %v551, 1.442695
    %v571 = vpow.pop %v570
    %v572 = vmul.f32 %v552, 1.442695
    %v573 = vpow.pop %v572
    %v574 = vmul.f32 %v553, 1.442695
    %v575 = vpow.pop %v574
    %v576 = vmul.f32 %v554, 1.442695
    %v577 = vpow.pop %v576
    %v578 = vmul.f32 %v555, 1.442695
    %v579 = vpow.pop %v578
    %v580 = vmul.f32 %v556, 1.442695
    %v581 = vpow.pop %v580
    %v582 = vmul.f32 %v557, 1.442695
    %v583 = vpow.pop %v582
    %v584 = vmul.f32 %v558, 1.442695
    %v585 = vpow.pop %v584
    %v586 = vmul.f32 %v559, 1.442695
    %v587 = vpow.pop %v586
    %v588 = vmul.f32 %v560, 1.442695
    %v589 = vpow.pop %v588
    %v590 = vmul.f32 %v561, 1.442695
    %v591 = vpow.pop %v590
    %v592 = vmul.f32 %v562, 1.442695
    %v593 = vpow.pop %v592
    %v594 = vmul.f32 %v563, 1.442695
    %v595 = vpow.pop %v594
    %v596 = vadd.f32 %v565, 1.0
    %v597 = vlog2.pop %v596
    %v598 = vmul.f32 %v597, 0.6931472
    %v599 = vmul.f32 -0.5, %v565
    %v600 = vadd.f32 %v599, 1.0
    %v601 = vmul.f32 %v600, %v565
    %v602 = vand.u32 2147483647, %v565
    %vm603 = vcmp.lt.f32.partialorder %v602, 0.0004427343
    %v604 = vsel %vm603, %v601, %v598
    %v605 = vadd.f32 %v567, 1.0
    %v606 = vlog2.pop %v605
    %v607 = vmul.f32 %v606, 0.6931472
    %v608 = vmul.f32 -0.5, %v567
    %v609 = vadd.f32 %v608, 1.0
    %v610 = vmul.f32 %v609, %v567
    %v611 = vand.u32 2147483647, %v567
    %vm612 = vcmp.lt.f32.partialorder %v611, 0.0004427343
    %v613 = vsel %vm612, %v610, %v607
    %v614 = vadd.f32 %v569, 1.0
    %v615 = vlog2.pop %v614
    %v616 = vmul.f32 %v615, 0.6931472
    %v617 = vmul.f32 -0.5, %v569
    %v618 = vadd.f32 %v617, 1.0
    %v619 = vmul.f32 %v618, %v569
    %v620 = vand.u32 2147483647, %v569
    %vm621 = vcmp.lt.f32.partialorder %v620, 0.0004427343
    %v622 = vsel %vm621, %v619, %v616
    %v623 = vadd.f32 %v571, 1.0
    %v624 = vlog2.pop %v623
    %v625 = vmul.f32 %v624, 0.6931472
    %v626 = vmul.f32 -0.5, %v571
    %v627 = vadd.f32 %v626, 1.0
    %v628 = vmul.f32 %v627, %v571
    %v629 = vand.u32 2147483647, %v571
    %vm630 = vcmp.lt.f32.partialorder %v629, 0.0004427343
    %v631 = vsel %vm630, %v628, %v625
    %v632 = vadd.f32 %v573, 1.0
    %v633 = vlog2.pop %v632
    %v634 = vmul.f32 %v633, 0.6931472
    %v635 = vmul.f32 -0.5, %v573
    %v636 = vadd.f32 %v635, 1.0
    %v637 = vmul.f32 %v636, %v573
    %v638 = vand.u32 2147483647, %v573
    %vm639 = vcmp.lt.f32.partialorder %v638, 0.0004427343
    %v640 = vsel %vm639, %v637, %v634
    %v641 = vadd.f32 %v575, 1.0
    %v642 = vlog2.pop %v641
    %v643 = vmul.f32 %v642, 0.6931472
    %v644 = vmul.f32 -0.5, %v575
    %v645 = vadd.f32 %v644, 1.0
    %v646 = vmul.f32 %v645, %v575
    %v647 = vand.u32 2147483647, %v575
    %vm648 = vcmp.lt.f32.partialorder %v647, 0.0004427343
    %v649 = vsel %vm648, %v646, %v643
    %v650 = vadd.f32 %v577, 1.0
    %v651 = vlog2.pop %v650
    %v652 = vmul.f32 %v651, 0.6931472
    %v653 = vmul.f32 -0.5, %v577
    %v654 = vadd.f32 %v653, 1.0
    %v655 = vmul.f32 %v654, %v577
    %v656 = vand.u32 2147483647, %v577
    %vm657 = vcmp.lt.f32.partialorder %v656, 0.0004427343
    %v658 = vsel %vm657, %v655, %v652
    %v659 = vadd.f32 %v579, 1.0
    %v660 = vlog2.pop %v659
    %v661 = vmul.f32 %v660, 0.6931472
    %v662 = vmul.f32 -0.5, %v579
    %v663 = vadd.f32 %v662, 1.0
    %v664 = vmul.f32 %v663, %v579
    %v665 = vand.u32 2147483647, %v579
    %vm666 = vcmp.lt.f32.partialorder %v665, 0.0004427343
    %v667 = vsel %vm666, %v664, %v661
    %v668 = vadd.f32 %v581, 1.0
    %v669 = vlog2.pop %v668
    %v670 = vmul.f32 %v669, 0.6931472
    %v671 = vmul.f32 -0.5, %v581
    %v672 = vadd.f32 %v671, 1.0
    %v673 = vmul.f32 %v672, %v581
    %v674 = vand.u32 2147483647, %v581
    %vm675 = vcmp.lt.f32.partialorder %v674, 0.0004427343
    %v676 = vsel %vm675, %v673, %v670
    %v677 = vadd.f32 %v583, 1.0
    %v678 = vlog2.pop %v677
    %v679 = vmul.f32 %v678, 0.6931472
    %v680 = vmul.f32 -0.5, %v583
    %v681 = vadd.f32 %v680, 1.0
    %v682 = vmul.f32 %v681, %v583
    %v683 = vand.u32 2147483647, %v583
    %vm684 = vcmp.lt.f32.partialorder %v683, 0.0004427343
    %v685 = vsel %vm684, %v682, %v679
    %v686 = vadd.f32 %v585, 1.0
    %v687 = vlog2.pop %v686
    %v688 = vmul.f32 %v687, 0.6931472
    %v689 = vmul.f32 -0.5, %v585
    %v690 = vadd.f32 %v689, 1.0
    %v691 = vmul.f32 %v690, %v585
    %v692 = vand.u32 2147483647, %v585
    %vm693 = vcmp.lt.f32.partialorder %v692, 0.0004427343
    %v694 = vsel %vm693, %v691, %v688
    %v695 = vadd.f32 %v587, 1.0
    %v696 = vlog2.pop %v695
    %v697 = vmul.f32 %v696, 0.6931472
    %v698 = vmul.f32 -0.5, %v587
    %v699 = vadd.f32 %v698, 1.0
    %v700 = vmul.f32 %v699, %v587
    %v701 = vand.u32 2147483647, %v587
    %vm702 = vcmp.lt.f32.partialorder %v701, 0.0004427343
    %v703 = vsel %vm702, %v700, %v697
    %v704 = vadd.f32 %v589, 1.0
    %v705 = vlog2.pop %v704
    %v706 = vmul.f32 %v705, 0.6931472
    %v707 = vmul.f32 -0.5, %v589
    %v708 = vadd.f32 %v707, 1.0
    %v709 = vmul.f32 %v708, %v589
    %v710 = vand.u32 2147483647, %v589
    %vm711 = vcmp.lt.f32.partialorder %v710, 0.0004427343
    %v712 = vsel %vm711, %v709, %v706
    %v713 = vadd.f32 %v591, 1.0
    %v714 = vlog2.pop %v713
    %v715 = vmul.f32 %v714, 0.6931472
    %v716 = vmul.f32 -0.5, %v591
    %v717 = vadd.f32 %v716, 1.0
    %v718 = vmul.f32 %v717, %v591
    %v719 = vand.u32 2147483647, %v591
    %vm720 = vcmp.lt.f32.partialorder %v719, 0.0004427343
    %v721 = vsel %vm720, %v718, %v715
    %v722 = vadd.f32 %v593, 1.0
    %v723 = vlog2.pop %v722
    %v724 = vmul.f32 %v723, 0.6931472
    %v725 = vmul.f32 -0.5, %v593
    %v726 = vadd.f32 %v725, 1.0
    %v727 = vmul.f32 %v726, %v593
    %v728 = vand.u32 2147483647, %v593
    %vm729 = vcmp.lt.f32.partialorder %v728, 0.0004427343
    %v730 = vsel %vm729, %v727, %v724
    %v731 = vadd.f32 %v595, 1.0
    %v732 = vlog2.pop %v731
    %v733 = vmul.f32 %v732, 0.6931472
    %v734 = vmul.f32 -0.5, %v595
    %v735 = vadd.f32 %v734, 1.0
    %v736 = vmul.f32 %v735, %v595
    %v737 = vand.u32 2147483647, %v595
    %vm738 = vcmp.lt.f32.partialorder %v737, 0.0004427343
    %v739 = vsel %vm738, %v736, %v733
    %v740 = vadd.f32 %v516, %v604
    %v741 = vadd.f32 %v517, %v613
    %v742 = vadd.f32 %v518, %v622
    %v743 = vadd.f32 %v519, %v631
    %v744 = vadd.f32 %v520, %v640
    %v745 = vadd.f32 %v521, %v649
    %v746 = vadd.f32 %v522, %v658
    %v747 = vadd.f32 %v523, %v667
    %v748 = vadd.f32 %v524, %v676
    %v749 = vadd.f32 %v525, %v685
    %v750 = vadd.f32 %v526, %v694
    %v751 = vadd.f32 %v527, %v703
    %v752 = vadd.f32 %v528, %v712
    %v753 = vadd.f32 %v529, %v721
    %v754 = vadd.f32 %v530, %v730
    %v755 = vadd.f32 %v531, %v739
    %v756 = vld [vmem:[#allocation8] sm:$0xff]
    %v757 = vld [vmem:[#allocation8 + $0x8] sm:$0xff]
    %v758 = vld [vmem:[#allocation8 + $0x10] sm:$0xff]
    %v759 = vld [vmem:[#allocation8 + $0x18] sm:$0xff]
    %v760 = vld [vmem:[#allocation8 + $0x20] sm:$0xff]
    %v761 = vld [vmem:[#allocation8 + $0x28] sm:$0xff]
    %v762 = vld [vmem:[#allocation8 + $0x30] sm:$0xff]
    %v763 = vld [vmem:[#allocation8 + $0x38] sm:$0xff]
    %v764 = vld [vmem:[#allocation8 + $0x40] sm:$0xff]
    %v765 = vld [vmem:[#allocation8 + $0x48] sm:$0xff]
    %v766 = vld [vmem:[#allocation8 + $0x50] sm:$0xff]
    %v767 = vld [vmem:[#allocation8 + $0x58] sm:$0xff]
    %v768 = vld [vmem:[#allocation8 + $0x60] sm:$0xff]
    %v769 = vld [vmem:[#allocation8 + $0x68] sm:$0xff]
    %v770 = vld [vmem:[#allocation8 + $0x70] sm:$0xff]
    %v771 = vld [vmem:[#allocation8 + $0x78] sm:$0xff]
    %v772 = vld [vmem:[%s6] sm:$0x1]
    %v774 = vperm.slane %v772, 0
    %776 = vmatpush.msra.mxu0 %v771
    %777 = vmatpush.msra.mxu0 %v770
    %778 = vmatpush.msra.mxu0 %v769
    %779 = vmatpush.msra.mxu0 %v768
    %780 = vmatpush.msra.mxu0 %v767
    %781 = vmatpush.msra.mxu0 %v766
    %782 = vmatpush.msra.mxu0 %v765
    %783 = vmatpush.msra.mxu0 %v764
    %784 = vmatpush.msra.mxu0 %v763
    %785 = vmatpush.msra.mxu0 %v762
    %786 = vmatpush.msra.mxu0 %v761
    %787 = vmatpush.msra.mxu0 %v760
    %788 = vmatpush.msra.mxu0 %v759
    %789 = vmatpush.msra.mxu0 %v758
    %790 = vmatpush.msra.mxu0 %v757
    %791 = vmatpush.msra.mxu0 %v756
    %792 = vmatmul.f32.gmra.mxu0 %v740
    %v793 = vpop.f32.mrf.mxu0
    %v794 = vadd.f32 %v774, %v793
    %795 = vmatmul.f32.gmra.mxu0 %v741
    %v796 = vpop.f32.mrf.mxu0
    %v797 = vadd.f32 %v774, %v796
    %798 = vmatmul.f32.gmra.mxu0 %v742
    %v799 = vpop.f32.mrf.mxu0
    %v800 = vadd.f32 %v774, %v799
    %801 = vmatmul.f32.gmra.mxu0 %v743
    %v802 = vpop.f32.mrf.mxu0
    %v803 = vadd.f32 %v774, %v802
    %804 = vmatmul.f32.gmra.mxu0 %v744
    %v805 = vpop.f32.mrf.mxu0
    %v806 = vadd.f32 %v774, %v805
    %807 = vmatmul.f32.gmra.mxu0 %v745
    %v808 = vpop.f32.mrf.mxu0
    %v809 = vadd.f32 %v774, %v808
    %810 = vmatmul.f32.gmra.mxu0 %v746
    %v811 = vpop.f32.mrf.mxu0
    %v812 = vadd.f32 %v774, %v811
    %813 = vmatmul.f32.gmra.mxu0 %v747
    %v814 = vpop.f32.mrf.mxu0
    %v815 = vadd.f32 %v774, %v814
    %816 = vmatmul.f32.gmra.mxu0 %v748
    %v817 = vpop.f32.mrf.mxu0
    %v818 = vadd.f32 %v774, %v817
    %819 = vmatmul.f32.gmra.mxu0 %v749
    %v820 = vpop.f32.mrf.mxu0
    %v821 = vadd.f32 %v774, %v820
    %822 = vmatmul.f32.gmra.mxu0 %v750
    %v823 = vpop.f32.mrf.mxu0
    %v824 = vadd.f32 %v774, %v823
    %825 = vmatmul.f32.gmra.mxu0 %v751
    %v826 = vpop.f32.mrf.mxu0
    %v827 = vadd.f32 %v774, %v826
    %828 = vmatmul.f32.gmra.mxu0 %v752
    %v829 = vpop.f32.mrf.mxu0
    %v830 = vadd.f32 %v774, %v829
    %831 = vmatmul.f32.gmra.mxu0 %v753
    %v832 = vpop.f32.mrf.mxu0
    %v833 = vadd.f32 %v774, %v832
    %834 = vmatmul.f32.gmra.mxu0 %v754
    %v835 = vpop.f32.mrf.mxu0
    %v836 = vadd.f32 %v774, %v835
    %837 = vmatmul.f32.gmra.mxu0 %v755
    %v838 = vpop.f32.mrf.mxu0
    %v839 = vadd.f32 %v774, %v838
    %840 = vdwg.mxu0
    %v841 = vmax.f32 %v794, 0.0
    %v842 = vmax.f32 %v797, 0.0
    %v843 = vmax.f32 %v800, 0.0
    %v844 = vmax.f32 %v803, 0.0
    %v845 = vmax.f32 %v806, 0.0
    %v846 = vmax.f32 %v809, 0.0
    %v847 = vmax.f32 %v812, 0.0
    %v848 = vmax.f32 %v815, 0.0
    %v849 = vmax.f32 %v818, 0.0
    %v850 = vmax.f32 %v821, 0.0
    %v851 = vmax.f32 %v824, 0.0
    %v852 = vmax.f32 %v827, 0.0
    %v853 = vmax.f32 %v830, 0.0
    %v854 = vmax.f32 %v833, 0.0
    %v855 = vmax.f32 %v836, 0.0
    %v856 = vmax.f32 %v839, 0.0
    %v857 = vand.u32 2147483647, %v794
    %v858 = vand.u32 2147483647, %v797
    %v859 = vand.u32 2147483647, %v800
    %v860 = vand.u32 2147483647, %v803
    %v861 = vand.u32 2147483647, %v806
    %v862 = vand.u32 2147483647, %v809
    %v863 = vand.u32 2147483647, %v812
    %v864 = vand.u32 2147483647, %v815
    %v865 = vand.u32 2147483647, %v818
    %v866 = vand.u32 2147483647, %v821
    %v867 = vand.u32 2147483647, %v824
    %v868 = vand.u32 2147483647, %v827
    %v869 = vand.u32 2147483647, %v830
    %v870 = vand.u32 2147483647, %v833
    %v871 = vand.u32 2147483647, %v836
    %v872 = vand.u32 2147483647, %v839
    %v873 = vsub.f32 0.0, %v857
    %v874 = vsub.f32 0.0, %v858
    %v875 = vsub.f32 0.0, %v859
    %v876 = vsub.f32 0.0, %v860
    %v877 = vsub.f32 0.0, %v861
    %v878 = vsub.f32 0.0, %v862
    %v879 = vsub.f32 0.0, %v863
    %v880 = vsub.f32 0.0, %v864
    %v881 = vsub.f32 0.0, %v865
    %v882 = vsub.f32 0.0, %v866
    %v883 = vsub.f32 0.0, %v867
    %v884 = vsub.f32 0.0, %v868
    %v885 = vsub.f32 0.0, %v869
    %v886 = vsub.f32 0.0, %v870
    %v887 = vsub.f32 0.0, %v871
    %v888 = vsub.f32 0.0, %v872
    %v889 = vmul.f32 %v873, 1.442695
    %v890 = vpow.pop %v889
    %v891 = vmul.f32 %v874, 1.442695
    %v892 = vpow.pop %v891
    %v893 = vmul.f32 %v875, 1.442695
    %v894 = vpow.pop %v893
    %v895 = vmul.f32 %v876, 1.442695
    %v896 = vpow.pop %v895
    %v897 = vmul.f32 %v877, 1.442695
    %v898 = vpow.pop %v897
    %v899 = vmul.f32 %v878, 1.442695
    %v900 = vpow.pop %v899
    %v901 = vmul.f32 %v879, 1.442695
    %v902 = vpow.pop %v901
    %v903 = vmul.f32 %v880, 1.442695
    %v904 = vpow.pop %v903
    %v905 = vmul.f32 %v881, 1.442695
    %v906 = vpow.pop %v905
    %v907 = vmul.f32 %v882, 1.442695
    %v908 = vpow.pop %v907
    %v909 = vmul.f32 %v883, 1.442695
    %v910 = vpow.pop %v909
    %v911 = vmul.f32 %v884, 1.442695
    %v912 = vpow.pop %v911
    %v913 = vmul.f32 %v885, 1.442695
    %v914 = vpow.pop %v913
    %v915 = vmul.f32 %v886, 1.442695
    %v916 = vpow.pop %v915
    %v917 = vmul.f32 %v887, 1.442695
    %v918 = vpow.pop %v917
    %v919 = vmul.f32 %v888, 1.442695
    %v920 = vpow.pop %v919
    %v921 = vadd.f32 %v890, 1.0
    %v922 = vlog2.pop %v921
    %v923 = vmul.f32 %v922, 0.6931472
    %v924 = vmul.f32 -0.5, %v890
    %v925 = vadd.f32 %v924, 1.0
    %v926 = vmul.f32 %v925, %v890
    %v927 = vand.u32 2147483647, %v890
    %vm928 = vcmp.lt.f32.partialorder %v927, 0.0004427343
    %v929 = vsel %vm928, %v926, %v923
    %v930 = vadd.f32 %v892, 1.0
    %v931 = vlog2.pop %v930
    %v932 = vmul.f32 %v931, 0.6931472
    %v933 = vmul.f32 -0.5, %v892
    %v934 = vadd.f32 %v933, 1.0
    %v935 = vmul.f32 %v934, %v892
    %v936 = vand.u32 2147483647, %v892
    %vm937 = vcmp.lt.f32.partialorder %v936, 0.0004427343
    %v938 = vsel %vm937, %v935, %v932
    %v939 = vadd.f32 %v894, 1.0
    %v940 = vlog2.pop %v939
    %v941 = vmul.f32 %v940, 0.6931472
    %v942 = vmul.f32 -0.5, %v894
    %v943 = vadd.f32 %v942, 1.0
    %v944 = vmul.f32 %v943, %v894
    %v945 = vand.u32 2147483647, %v894
    %vm946 = vcmp.lt.f32.partialorder %v945, 0.0004427343
    %v947 = vsel %vm946, %v944, %v941
    %v948 = vadd.f32 %v896, 1.0
    %v949 = vlog2.pop %v948
    %v950 = vmul.f32 %v949, 0.6931472
    %v951 = vmul.f32 -0.5, %v896
    %v952 = vadd.f32 %v951, 1.0
    %v953 = vmul.f32 %v952, %v896
    %v954 = vand.u32 2147483647, %v896
    %vm955 = vcmp.lt.f32.partialorder %v954, 0.0004427343
    %v956 = vsel %vm955, %v953, %v950
    %v957 = vadd.f32 %v898, 1.0
    %v958 = vlog2.pop %v957
    %v959 = vmul.f32 %v958, 0.6931472
    %v960 = vmul.f32 -0.5, %v898
    %v961 = vadd.f32 %v960, 1.0
    %v962 = vmul.f32 %v961, %v898
    %v963 = vand.u32 2147483647, %v898
    %vm964 = vcmp.lt.f32.partialorder %v963, 0.0004427343
    %v965 = vsel %vm964, %v962, %v959
    %v966 = vadd.f32 %v900, 1.0
    %v967 = vlog2.pop %v966
    %v968 = vmul.f32 %v967, 0.6931472
    %v969 = vmul.f32 -0.5, %v900
    %v970 = vadd.f32 %v969, 1.0
    %v971 = vmul.f32 %v970, %v900
    %v972 = vand.u32 2147483647, %v900
    %vm973 = vcmp.lt.f32.partialorder %v972, 0.0004427343
    %v974 = vsel %vm973, %v971, %v968
    %v975 = vadd.f32 %v902, 1.0
    %v976 = vlog2.pop %v975
    %v977 = vmul.f32 %v976, 0.6931472
    %v978 = vmul.f32 -0.5, %v902
    %v979 = vadd.f32 %v978, 1.0
    %v980 = vmul.f32 %v979, %v902
    %v981 = vand.u32 2147483647, %v902
    %vm982 = vcmp.lt.f32.partialorder %v981, 0.0004427343
    %v983 = vsel %vm982, %v980, %v977
    %v984 = vadd.f32 %v904, 1.0
    %v985 = vlog2.pop %v984
    %v986 = vmul.f32 %v985, 0.6931472
    %v987 = vmul.f32 -0.5, %v904
    %v988 = vadd.f32 %v987, 1.0
    %v989 = vmul.f32 %v988, %v904
    %v990 = vand.u32 2147483647, %v904
    %vm991 = vcmp.lt.f32.partialorder %v990, 0.0004427343
    %v992 = vsel %vm991, %v989, %v986
    %v993 = vadd.f32 %v906, 1.0
    %v994 = vlog2.pop %v993
    %v995 = vmul.f32 %v994, 0.6931472
    %v996 = vmul.f32 -0.5, %v906
    %v997 = vadd.f32 %v996, 1.0
    %v998 = vmul.f32 %v997, %v906
    %v999 = vand.u32 2147483647, %v906
    %vm1000 = vcmp.lt.f32.partialorder %v999, 0.0004427343
    %v1001 = vsel %vm1000, %v998, %v995
    %v1002 = vadd.f32 %v908, 1.0
    %v1003 = vlog2.pop %v1002
    %v1004 = vmul.f32 %v1003, 0.6931472
    %v1005 = vmul.f32 -0.5, %v908
    %v1006 = vadd.f32 %v1005, 1.0
    %v1007 = vmul.f32 %v1006, %v908
    %v1008 = vand.u32 2147483647, %v908
    %vm1009 = vcmp.lt.f32.partialorder %v1008, 0.0004427343
    %v1010 = vsel %vm1009, %v1007, %v1004
    %v1011 = vadd.f32 %v910, 1.0
    %v1012 = vlog2.pop %v1011
    %v1013 = vmul.f32 %v1012, 0.6931472
    %v1014 = vmul.f32 -0.5, %v910
    %v1015 = vadd.f32 %v1014, 1.0
    %v1016 = vmul.f32 %v1015, %v910
    %v1017 = vand.u32 2147483647, %v910
    %vm1018 = vcmp.lt.f32.partialorder %v1017, 0.0004427343
    %v1019 = vsel %vm1018, %v1016, %v1013
    %v1020 = vadd.f32 %v912, 1.0
    %v1021 = vlog2.pop %v1020
    %v1022 = vmul.f32 %v1021, 0.6931472
    %v1023 = vmul.f32 -0.5, %v912
    %v1024 = vadd.f32 %v1023, 1.0
    %v1025 = vmul.f32 %v1024, %v912
    %v1026 = vand.u32 2147483647, %v912
    %vm1027 = vcmp.lt.f32.partialorder %v1026, 0.0004427343
    %v1028 = vsel %vm1027, %v1025, %v1022
    %v1029 = vadd.f32 %v914, 1.0
    %v1030 = vlog2.pop %v1029
    %v1031 = vmul.f32 %v1030, 0.6931472
    %v1032 = vmul.f32 -0.5, %v914
    %v1033 = vadd.f32 %v1032, 1.0
    %v1034 = vmul.f32 %v1033, %v914
    %v1035 = vand.u32 2147483647, %v914
    %vm1036 = vcmp.lt.f32.partialorder %v1035, 0.0004427343
    %v1037 = vsel %vm1036, %v1034, %v1031
    %v1038 = vadd.f32 %v916, 1.0
    %v1039 = vlog2.pop %v1038
    %v1040 = vmul.f32 %v1039, 0.6931472
    %v1041 = vmul.f32 -0.5, %v916
    %v1042 = vadd.f32 %v1041, 1.0
    %v1043 = vmul.f32 %v1042, %v916
    %v1044 = vand.u32 2147483647, %v916
    %vm1045 = vcmp.lt.f32.partialorder %v1044, 0.0004427343
    %v1046 = vsel %vm1045, %v1043, %v1040
    %v1047 = vadd.f32 %v918, 1.0
    %v1048 = vlog2.pop %v1047
    %v1049 = vmul.f32 %v1048, 0.6931472
    %v1050 = vmul.f32 -0.5, %v918
    %v1051 = vadd.f32 %v1050, 1.0
    %v1052 = vmul.f32 %v1051, %v918
    %v1053 = vand.u32 2147483647, %v918
    %vm1054 = vcmp.lt.f32.partialorder %v1053, 0.0004427343
    %v1055 = vsel %vm1054, %v1052, %v1049
    %v1056 = vadd.f32 %v920, 1.0
    %v1057 = vlog2.pop %v1056
    %v1058 = vmul.f32 %v1057, 0.6931472
    %v1059 = vmul.f32 -0.5, %v920
    %v1060 = vadd.f32 %v1059, 1.0
    %v1061 = vmul.f32 %v1060, %v920
    %v1062 = vand.u32 2147483647, %v920
    %vm1063 = vcmp.lt.f32.partialorder %v1062, 0.0004427343
    %v1064 = vsel %vm1063, %v1061, %v1058
    %v1065 = vadd.f32 %v841, %v929
    %v1066 = vadd.f32 %v842, %v938
    %v1067 = vadd.f32 %v843, %v947
    %v1068 = vadd.f32 %v844, %v956
    %v1069 = vadd.f32 %v845, %v965
    %v1070 = vadd.f32 %v846, %v974
    %v1071 = vadd.f32 %v847, %v983
    %v1072 = vadd.f32 %v848, %v992
    %v1073 = vadd.f32 %v849, %v1001
    %v1074 = vadd.f32 %v850, %v1010
    %v1075 = vadd.f32 %v851, %v1019
    %v1076 = vadd.f32 %v852, %v1028
    %v1077 = vadd.f32 %v853, %v1037
    %v1078 = vadd.f32 %v854, %v1046
    %v1079 = vadd.f32 %v855, %v1055
    %v1080 = vadd.f32 %v856, %v1064
    %1081 = vst [vmem:[#allocation10] sm:$0xff] %v1065
    %1082 = vst [vmem:[#allocation10 + $0x8] sm:$0xff] %v1066
    %1083 = vst [vmem:[#allocation10 + $0x10] sm:$0xff] %v1067
    %1084 = vst [vmem:[#allocation10 + $0x18] sm:$0xff] %v1068
    %1085 = vst [vmem:[#allocation10 + $0x20] sm:$0xff] %v1069
    %1086 = vst [vmem:[#allocation10 + $0x28] sm:$0xff] %v1070
    %1087 = vst [vmem:[#allocation10 + $0x30] sm:$0xff] %v1071
    %1088 = vst [vmem:[#allocation10 + $0x38] sm:$0xff] %v1072
    %1089 = vst [vmem:[#allocation10 + $0x40] sm:$0xff] %v1073
    %1090 = vst [vmem:[#allocation10 + $0x48] sm:$0xff] %v1074
    %1091 = vst [vmem:[#allocation10 + $0x50] sm:$0xff] %v1075
    %1092 = vst [vmem:[#allocation10 + $0x58] sm:$0xff] %v1076
    %1093 = vst [vmem:[#allocation10 + $0x60] sm:$0xff] %v1077
    %1094 = vst [vmem:[#allocation10 + $0x68] sm:$0xff] %v1078
    %1095 = vst [vmem:[#allocation10 + $0x70] sm:$0xff] %v1079
    %1096 = vst [vmem:[#allocation10 + $0x78] sm:$0xff] %v1080
    // Predicated region
    $region46: #{tpu_custom_call.1} parent=1 // pred_check
      _
    $region47: #{tpu_custom_call.1} parent=1 // pred_check_branch
      %1098 = sbr.rel (0) target = $region49
    $region48: #{tpu_custom_call.1} parent=1 // pred_region
      %1100 = vsyncadd [#allocation4], 0
      %s1101 = sshll.u32 [#allocation10], 4
      %s1102 = int_to_ptr.vmem [resolvable:$true] %s1101
      %s1103 = sshll.u32 %s7, 4
      %s1104 = int_to_ptr.hbm [resolvable:$true] %s1103
      %1109 = dma.vmem_to_hbm [thread:$0]  %s1102, 2048, %s1104, [#allocation4], 128, 128, 8
    $region49: #{tpu_custom_call.1} parent=1 // pred_fallthru
      _
    // Predicated region
    $region50: #{tpu_custom_call.1} parent=1 // pred_check
      _
    $region51: #{tpu_custom_call.1} parent=1 // pred_check_branch
      %1111 = sbr.rel (0) target = $region53
    $region52: #{tpu_custom_call.1} parent=1 // pred_region
      %1113 = dma.done [#allocation4], 2048
    $region53: #{tpu_custom_call.1} parent=1 // pred_fallthru
      _
    %1114 = vsyncpa [#allocation3], 1
    %1115 = vsyncpa [#allocation6], 1
    %1116 = vsyncpa [#allocation9], 1
    %1117 = vsyncpa [#allocation4], 1

</llo_original>
